<compile_context>
chip_gen: v6e
topology: v6e:2x2x1
jax: 0.10.0
libtpu: 0.0.40
codegen_flags: <defaults>
</compile_context>

<pallas_src>
import functools

import jax
import jax.numpy as jnp
from jax.experimental import pallas as pl
from jax.experimental.pallas import tpu as pltpu


# ---------------------------------------------------------------------------
# Kernels
# ---------------------------------------------------------------------------

def _attn_layer_kernel(x_ref, g1_ref, b1_ref, wqkv_ref, bqkv_ref, wo_ref,
                       bo_ref, out_ref, *, num_heads, head_dim, eps):
    """One batch element per grid step.

    x_ref:    (1, T, E) hidden states (residual input)
    g1/b1:    (1, E) LayerNorm1 gamma / beta
    wqkv_ref: (H, E, 3*Dh) per-head fused Q|K|V weights (q part pre-scaled)
    bqkv_ref: (H, 1, 3*Dh) per-head fused biases (q part pre-scaled)
    wo_ref:   (H, Dh, E) per-head out_proj weight blocks
    bo_ref:   (1, E) out_proj bias
    out_ref:  (1, T, E) = x + attention(LN1(x))
    """
    H, Dh = num_heads, head_dim
    x = x_ref[0]                                   # (T, E), native dtype
    xf = x.astype(jnp.float32)

    # LayerNorm1 (f32 math).
    mu = jnp.mean(xf, axis=-1, keepdims=True)
    var = jnp.mean(jnp.square(xf - mu), axis=-1, keepdims=True)
    xn = (xf - mu) * jax.lax.rsqrt(var + eps)
    xn = xn * g1_ref[...].astype(jnp.float32) + b1_ref[...].astype(jnp.float32)
    xn = xn.astype(x.dtype)                        # feed MXU in native dtype

    T, E = xn.shape

    # Fused, head-batched Q/K/V projection: (H,T,E) x (H,E,3Dh) -> (H,T,3Dh).
    x3 = jnp.broadcast_to(xn[None, :, :], (H, T, E))
    qkv = jax.lax.dot_general(
        x3, wqkv_ref[...],
        dimension_numbers=(((2,), (1,)), ((0,), (0,))),
        preferred_element_type=jnp.float32)
    qkv = qkv + bqkv_ref[...].astype(jnp.float32)  # (H, T, 3Dh)

    q = qkv[:, :, 0:Dh].astype(x.dtype)            # scale already folded in
    k = qkv[:, :, Dh:2 * Dh].astype(x.dtype)
    v = qkv[:, :, 2 * Dh:3 * Dh].astype(x.dtype)

    # Scores for all heads at once: (H, T, T).
    s = jax.lax.dot_general(
        q, k, dimension_numbers=(((2,), (2,)), ((0,), (0,))),
        preferred_element_type=jnp.float32)

    # Softmax (max-subtracted); reciprocal goes to the EUP slot.
    m = jnp.max(s, axis=-1, keepdims=True)
    p = jnp.exp(s - m)
    denom = jnp.sum(p, axis=-1, keepdims=True)
    probs = p * pl.reciprocal(denom, approx=True)
    # TODO(synk): dropout on probs (training path) not implemented.

    # Context: (H, T, Dh).
    ctx = jax.lax.dot_general(
        probs.astype(x.dtype), v,
        dimension_numbers=(((2,), (1,)), ((0,), (0,))),
        preferred_element_type=jnp.float32)

    # Per-head output projection, then head-sum: sum_h ctx_h @ Wo_h -> (T, E).
    o_h = jax.lax.dot_general(
        ctx.astype(x.dtype), wo_ref[...],
        dimension_numbers=(((2,), (1,)), ((0,), (0,))),
        preferred_element_type=jnp.float32)        # (H, T, E)
    attn = jnp.sum(o_h, axis=0) + bo_ref[...].astype(jnp.float32)

    out_ref[0] = (xf + attn).astype(out_ref.dtype)


def _mlp_layer_kernel(x_ref, g2_ref, b2_ref, w1_ref, b1_ref, w2_ref, b2f_ref,
                      out_ref, *, eps):
    """Row-tile of the flattened (B*T, E) activations.

    out = x + fc2(quick_gelu(fc1(LN2(x))))
    """
    x = x_ref[...]                                 # (tm, E)
    xf = x.astype(jnp.float32)

    mu = jnp.mean(xf, axis=-1, keepdims=True)
    var = jnp.mean(jnp.square(xf - mu), axis=-1, keepdims=True)
    xn = (xf - mu) * jax.lax.rsqrt(var + eps)
    xn = xn * g2_ref[...].astype(jnp.float32) + b2_ref[...].astype(jnp.float32)

    h = jnp.dot(xn.astype(x.dtype), w1_ref[...],
                preferred_element_type=jnp.float32)
    h = h + b1_ref[...].astype(jnp.float32)
    h = h * jax.nn.sigmoid(1.702 * h)              # quick_gelu (CLIP default)

    y = jnp.dot(h.astype(x.dtype), w2_ref[...],
                preferred_element_type=jnp.float32)
    y = y + b2f_ref[...].astype(jnp.float32)

    out_ref[...] = (xf + y).astype(out_ref.dtype)


# ---------------------------------------------------------------------------
# Wrappers
# ---------------------------------------------------------------------------

def prepare_layer_params(p, *, num_heads):
    """Convert PyTorch-layout layer params to kernel layout ONCE (load time).

    PyTorch Linear stores (out, in); kernel wants per-head (in, out) blocks.
    Attention scale is folded into Wq / bq here.
    """
    E = p["wq"].shape[0]
    H = num_heads
    Dh = E // H
    scale = Dh ** (-0.5)

    def to_heads(w):  # (E_out, E_in) -> (H, E_in, Dh)
        return jnp.transpose(w.reshape(H, Dh, E), (0, 2, 1))

    wq_h = to_heads(p["wq"]) * scale
    wk_h = to_heads(p["wk"])
    wv_h = to_heads(p["wv"])
    wqkv = jnp.concatenate([wq_h, wk_h, wv_h], axis=-1)        # (H, E, 3Dh)

    bq_h = p["bq"].reshape(H, 1, Dh) * scale
    bk_h = p["bk"].reshape(H, 1, Dh)
    bv_h = p["bv"].reshape(H, 1, Dh)
    bqkv = jnp.concatenate([bq_h, bk_h, bv_h], axis=-1)        # (H, 1, 3Dh)

    wo = jnp.transpose(p["wo"]).reshape(H, Dh, E)              # (H, Dh, E)

    return {
        "ln1_g": p["ln1_g"].reshape(1, E), "ln1_b": p["ln1_b"].reshape(1, E),
        "wqkv": wqkv, "bqkv": bqkv, "wo": wo, "bo": p["bo"].reshape(1, E),
        "ln2_g": p["ln2_g"].reshape(1, E), "ln2_b": p["ln2_b"].reshape(1, E),
        "w_fc1": jnp.transpose(p["w_fc1"]), "b_fc1": p["b_fc1"].reshape(1, -1),
        "w_fc2": jnp.transpose(p["w_fc2"]), "b_fc2": p["b_fc2"].reshape(1, E),
    }


def _attention_block(x, kp, *, num_heads, head_dim, eps):
    B, T, E = x.shape
    H, Dh = num_heads, head_dim
    kernel = functools.partial(_attn_layer_kernel, num_heads=H, head_dim=Dh,
                               eps=eps)
    bytes_per = jnp.dtype(x.dtype).itemsize
    flops = int(2 * B * (T * E * 3 * E + 2 * H * T * T * Dh + T * E * E))
    cost = pl.CostEstimate(
        flops=flops,
        transcendentals=int(B * H * T * T),
        bytes_accessed=int(bytes_per * (2 * B * T * E + 4 * E * E + 4 * E)))

    return pl.pallas_call(
        kernel,
        out_shape=jax.ShapeDtypeStruct((B, T, E), x.dtype),
        grid_spec=pltpu.PrefetchScalarGridSpec(
            num_scalar_prefetch=0,
            grid=(B,),
            in_specs=[
                pl.BlockSpec((1, T, E), lambda b: (b, 0, 0)),      # x
                pl.BlockSpec((1, E), lambda b: (0, 0)),            # ln1 gamma
                pl.BlockSpec((1, E), lambda b: (0, 0)),            # ln1 beta
                pl.BlockSpec((H, E, 3 * Dh), lambda b: (0, 0, 0)),  # wqkv
                pl.BlockSpec((H, 1, 3 * Dh), lambda b: (0, 0, 0)),  # bqkv
                pl.BlockSpec((H, Dh, E), lambda b: (0, 0, 0)),      # wo
                pl.BlockSpec((1, E), lambda b: (0, 0)),             # bo
            ],
            out_specs=pl.BlockSpec((1, T, E), lambda b: (b, 0, 0)),
        ),
        compiler_params=pltpu.CompilerParams(
            dimension_semantics=("parallel",)),
        cost_estimate=cost,
    )(x, kp["ln1_g"], kp["ln1_b"], kp["wqkv"], kp["bqkv"], kp["wo"], kp["bo"])


def _mlp_block(x, kp, *, eps):
    B, T, E = x.shape
    inter = kp["w_fc1"].shape[1]
    rows = B * T
    x2 = x.reshape(rows, E)

    tm = 256 if rows >= 256 else rows
    grid = (pl.cdiv(rows, tm),)

    kernel = functools.partial(_mlp_layer_kernel, eps=eps)
    bytes_per = jnp.dtype(x.dtype).itemsize
    cost = pl.CostEstimate(
        flops=int(4 * rows * E * inter),
        transcendentals=int(rows * inter),
        bytes_accessed=int(bytes_per * (2 * rows * E + 2 * E * inter)))

    out = pl.pallas_call(
        kernel,
        out_shape=jax.ShapeDtypeStruct((rows, E), x.dtype),
        grid_spec=pltpu.PrefetchScalarGridSpec(
            num_scalar_prefetch=0,
            grid=grid,
            in_specs=[
                pl.BlockSpec((tm, E), lambda i: (i, 0)),      # x rows
                pl.BlockSpec((1, E), lambda i: (0, 0)),       # ln2 gamma
                pl.BlockSpec((1, E), lambda i: (0, 0)),       # ln2 beta
                pl.BlockSpec((E, inter), lambda i: (0, 0)),   # fc1 weight
                pl.BlockSpec((1, inter), lambda i: (0, 0)),   # fc1 bias
                pl.BlockSpec((inter, E), lambda i: (0, 0)),   # fc2 weight
                pl.BlockSpec((1, E), lambda i: (0, 0)),       # fc2 bias
            ],
            out_specs=pl.BlockSpec((tm, E), lambda i: (i, 0)),
        ),
        compiler_params=pltpu.CompilerParams(
            dimension_semantics=("parallel",)),
        cost_estimate=cost,
    )(x2, kp["ln2_g"], kp["ln2_b"], kp["w_fc1"], kp["b_fc1"], kp["w_fc2"],
      kp["b_fc2"])
    return out.reshape(B, T, E)


def clip_encoder(inputs_embeds, kernel_layers, *, num_heads, eps=1e-5):
    """CLIPEncoder forward (no masks, no conditional path, eval mode).

    kernel_layers: list of dicts produced by prepare_layer_params().
    Returns the last hidden state, (B, T, E).
    """
    B, T, E = inputs_embeds.shape
    head_dim = E // num_heads
    x = inputs_embeds
    for kp in kernel_layers:
        x = _attention_block(x, kp, num_heads=num_heads, head_dim=head_dim,
                             eps=eps)
        x = _mlp_block(x, kp, eps=eps)
    return x


# ---------------------------------------------------------------------------
# Pure-JAX reference (mirrors the PyTorch forward, no masks / dropout)
# ---------------------------------------------------------------------------

def _layer_norm_ref(x, g, b, eps):
    mu = x.mean(-1, keepdims=True)
    var = ((x - mu) ** 2).mean(-1, keepdims=True)
    return (x - mu) / jnp.sqrt(var + eps) * g + b


def clip_encoder_ref(inputs_embeds, layers, *, num_heads, eps=1e-5):
    x = inputs_embeds
    B, T, E = x.shape
    Dh = E // num_heads
    scale = Dh ** (-0.5)

    def lin(z, w, b):                              # PyTorch (out, in) layout
        return jnp.einsum("bte,oe->bto", z, w) + b

    for p in layers:
        residual = x
        h = _layer_norm_ref(x, p["ln1_g"], p["ln1_b"], eps)
        q = lin(h, p["wq"], p["bq"]) * scale
        k = lin(h, p["wk"], p["bk"])
        v = lin(h, p["wv"], p["bv"])

        def shape_heads(t):
            return t.reshape(B, T, num_heads, Dh).transpose(0, 2, 1, 3)

        q, k, v = shape_heads(q), shape_heads(k), shape_heads(v)
        w = jax.nn.softmax(jnp.einsum("bhqd,bhkd->bhqk", q, k), axis=-1)
        o = jnp.einsum("bhqk,bhkd->bhqd", w, v)
        o = o.transpose(0, 2, 1, 3).reshape(B, T, E)
        x = residual + lin(o, p["wo"], p["bo"])

        residual = x
        h = _layer_norm_ref(x, p["ln2_g"], p["ln2_b"], eps)
        h = lin(h, p["w_fc1"], p["b_fc1"])
        h = h * jax.nn.sigmoid(1.702 * h)          # quick_gelu
        h = lin(h, p["w_fc2"], p["b_fc2"])
        x = residual + h
    return x


# ---------------------------------------------------------------------------
# Parameter init (PyTorch layout) + demo
# ---------------------------------------------------------------------------

def init_layer_params(key, embed_dim, intermediate_size):
    keys = jax.random.split(key, 16)
    s = 0.05
    E, I = embed_dim, intermediate_size
    n = jax.random.normal
    return {
        "ln1_g": 1.0 + s * n(keys[0], (E,), jnp.float32),
        "ln1_b": s * n(keys[1], (E,), jnp.float32),
        "wq": s * n(keys[2], (E, E), jnp.float32),
        "bq": s * n(keys[3], (E,), jnp.float32),
        "wk": s * n(keys[4], (E, E), jnp.float32),
        "bk": s * n(keys[5], (E,), jnp.float32),
        "wv": s * n(keys[6], (E, E), jnp.float32),
        "bv": s * n(keys[7], (E,), jnp.float32),
        "wo": s * n(keys[8], (E, E), jnp.float32),
        "bo": s * n(keys[9], (E,), jnp.float32),
        "ln2_g": 1.0 + s * n(keys[10], (E,), jnp.float32),
        "ln2_b": s * n(keys[11], (E,), jnp.float32),
        "w_fc1": s * n(keys[12], (I, E), jnp.float32),
        "b_fc1": s * n(keys[13], (I,), jnp.float32),
        "w_fc2": s * n(keys[14], (E, I), jnp.float32),
        "b_fc2": s * n(keys[15], (E,), jnp.float32),
    }


if __name__ == "__main__":
    B, T, E, H = 2, 8, 32, 4          # batch, seq, hidden, heads (head_dim=8)
    INTER = 4 * E                     # CLIP MLP intermediate size
    NUM_LAYERS = 2
    EPS = 1e-5

    key = jax.random.PRNGKey(0)
    k_x, k_p = jax.random.split(key)
    inputs_embeds = jax.random.normal(k_x, (B, T, E), jnp.float32)

    layer_keys = jax.random.split(k_p, NUM_LAYERS)
    torch_layers = [init_layer_params(k, E, INTER) for k in layer_keys]
    # One-time conversion to kernel layout (transposes / head split / scale
    # folding happen here, at parameter-load time, not per forward call).
    kernel_layers = [prepare_layer_params(p, num_heads=H) for p in torch_layers]

    out = clip_encoder(inputs_embeds, kernel_layers, num_heads=H, eps=EPS)
    out = jax.block_until_ready(out)

    ref = clip_encoder_ref(inputs_embeds, torch_layers, num_heads=H, eps=EPS)
    assert out.shape == (B, T, E)
    assert jnp.allclose(out, ref, atol=2e-3, rtol=2e-3), "mismatch vs reference"

    print("KERNEL_OK")
</pallas_src>

<mosaic_0001>
module attributes {stable_mosaic.version = 11 : i64} {
  func.func @_attn_layer_kernel(%arg0: i32, %arg1: memref<1x8x32xf32, #tpu.memory_space<vmem>>, %arg2: memref<1x32xf32, #tpu.memory_space<vmem>>, %arg3: memref<1x32xf32, #tpu.memory_space<vmem>>, %arg4: memref<4x32x24xf32, #tpu.memory_space<vmem>>, %arg5: memref<4x1x24xf32, #tpu.memory_space<vmem>>, %arg6: memref<4x8x32xf32, #tpu.memory_space<vmem>>, %arg7: memref<1x32xf32, #tpu.memory_space<vmem>>, %arg8: memref<1x8x32xf32, #tpu.memory_space<vmem>>) attributes {dimension_semantics = [#tpu.dimension_semantics<parallel>], iteration_bounds = array<i64: 2>, scalar_prefetch = 0 : i64, scratch_operands = 0 : i64, tpu.core_type = #tpu.core_type<tc>, window_params = [{transform_indices = @transform_0, window_bounds = array<i64: 1, 8, 32>}, {pipeline_mode = #tpu.pipeline_mode<synchronous>, transform_indices = @transform_1, window_bounds = array<i64: 1, 32>}, {pipeline_mode = #tpu.pipeline_mode<synchronous>, transform_indices = @transform_2, window_bounds = array<i64: 1, 32>}, {pipeline_mode = #tpu.pipeline_mode<synchronous>, transform_indices = @transform_3, window_bounds = array<i64: 4, 32, 24>}, {pipeline_mode = #tpu.pipeline_mode<synchronous>, transform_indices = @transform_4, window_bounds = array<i64: 4, 1, 24>}, {pipeline_mode = #tpu.pipeline_mode<synchronous>, transform_indices = @transform_5, window_bounds = array<i64: 4, 8, 32>}, {pipeline_mode = #tpu.pipeline_mode<synchronous>, transform_indices = @transform_6, window_bounds = array<i64: 1, 32>}, {transform_indices = @transform_7, window_bounds = array<i64: 1, 8, 32>}]} {
    %c0 = arith.constant 0 : index
    %c0_0 = arith.constant 0 : index
    %c0_1 = arith.constant 0 : index
    %0 = vector.load %arg1[%c0, %c0_0, %c0_1] : memref<1x8x32xf32, #tpu.memory_space<vmem>>, vector<1x8x32xf32>
    %1 = vector.shape_cast %0 : vector<1x8x32xf32> to vector<8x32xf32>
    %cst = arith.constant dense<0.000000e+00> : vector<8xf32>
    %2 = vector.multi_reduction <add>, %1, %cst [1] : vector<8x32xf32> to vector<8xf32>
    %3 = vector.shape_cast %2 : vector<8xf32> to vector<8x1xf32>
    %cst_2 = arith.constant 3.200000e+01 : f32
    %4 = vector.broadcast %cst_2 : f32 to vector<8x1xf32>
    %5 = arith.divf %3, %4 : vector<8x1xf32>
    %6 = vector.broadcast %5 : vector<8x1xf32> to vector<8x32xf32>
    %7 = arith.subf %1, %6 : vector<8x32xf32>
    %8 = arith.mulf %7, %7 : vector<8x32xf32>
    %cst_3 = arith.constant dense<0.000000e+00> : vector<8xf32>
    %9 = vector.multi_reduction <add>, %8, %cst_3 [1] : vector<8x32xf32> to vector<8xf32>
    %10 = vector.shape_cast %9 : vector<8xf32> to vector<8x1xf32>
    %cst_4 = arith.constant 3.200000e+01 : f32
    %11 = vector.broadcast %cst_4 : f32 to vector<8x1xf32>
    %12 = arith.divf %10, %11 : vector<8x1xf32>
    %13 = vector.broadcast %5 : vector<8x1xf32> to vector<8x32xf32>
    %14 = arith.subf %1, %13 : vector<8x32xf32>
    %cst_5 = arith.constant 9.99999974E-6 : f32
    %15 = vector.broadcast %cst_5 : f32 to vector<8x1xf32>
    %16 = arith.addf %12, %15 : vector<8x1xf32>
    %17 = math.rsqrt %16 : vector<8x1xf32>
    %18 = vector.broadcast %17 : vector<8x1xf32> to vector<8x32xf32>
    %19 = arith.mulf %14, %18 : vector<8x32xf32>
    %c0_6 = arith.constant 0 : index
    %c0_7 = arith.constant 0 : index
    %20 = vector.load %arg2[%c0_6, %c0_7] : memref<1x32xf32, #tpu.memory_space<vmem>>, vector<1x32xf32>
    %21 = vector.broadcast %20 : vector<1x32xf32> to vector<8x32xf32>
    %22 = arith.mulf %19, %21 : vector<8x32xf32>
    %c0_8 = arith.constant 0 : index
    %c0_9 = arith.constant 0 : index
    %23 = vector.load %arg3[%c0_8, %c0_9] : memref<1x32xf32, #tpu.memory_space<vmem>>, vector<1x32xf32>
    %24 = vector.broadcast %23 : vector<1x32xf32> to vector<8x32xf32>
    %25 = arith.addf %22, %24 : vector<8x32xf32>
    %26 = vector.shape_cast %25 : vector<8x32xf32> to vector<1x8x32xf32>
    %27 = vector.shape_cast %26 : vector<1x8x32xf32> to vector<1x8x32xf32>
    %28 = vector.broadcast %27 : vector<1x8x32xf32> to vector<4x8x32xf32>
    %c0_10 = arith.constant 0 : index
    %c0_11 = arith.constant 0 : index
    %c0_12 = arith.constant 0 : index
    %29 = vector.load %arg4[%c0_10, %c0_11, %c0_12] : memref<4x32x24xf32, #tpu.memory_space<vmem>>, vector<4x32x24xf32>
    %cst_13 = arith.constant dense<0.000000e+00> : vector<4x8x24xf32>
    %30 = tpu.matmul %28, %29, %cst_13 {dimension_numbers = #tpu.dot_dimension_numbers<[2], [1], [1], [2], [0, 0, 0, 1, 1, 2], [0], [0]>} : vector<4x8x32xf32>, vector<4x32x24xf32>, vector<4x8x24xf32> -> vector<4x8x24xf32>
    %c0_14 = arith.constant 0 : index
    %c0_15 = arith.constant 0 : index
    %c0_16 = arith.constant 0 : index
    %31 = vector.load %arg5[%c0_14, %c0_15, %c0_16] : memref<4x1x24xf32, #tpu.memory_space<vmem>>, vector<4x1x24xf32>
    %32 = vector.broadcast %31 : vector<4x1x24xf32> to vector<4x8x24xf32>
    %33 = arith.addf %30, %32 : vector<4x8x24xf32>
    %34 = vector.extract_strided_slice %33 {offsets = [0, 0, 0], sizes = [4, 8, 8], strides = [1, 1, 1]} : vector<4x8x24xf32> to vector<4x8x8xf32>
    %35 = vector.extract_strided_slice %33 {offsets = [0, 0, 8], sizes = [4, 8, 8], strides = [1, 1, 1]} : vector<4x8x24xf32> to vector<4x8x8xf32>
    %36 = vector.extract_strided_slice %33 {offsets = [0, 0, 16], sizes = [4, 8, 8], strides = [1, 1, 1]} : vector<4x8x24xf32> to vector<4x8x8xf32>
    %cst_17 = arith.constant dense<0.000000e+00> : vector<4x8x8xf32>
    %37 = tpu.matmul %34, %35, %cst_17 {dimension_numbers = #tpu.dot_dimension_numbers<[2], [2], [1], [1], [0, 0, 0, 1, 1, 1], [0], [0]>} : vector<4x8x8xf32>, vector<4x8x8xf32>, vector<4x8x8xf32> -> vector<4x8x8xf32>
    %cst_18 = arith.constant dense<0xFF800000> : vector<4x8xf32>
    %38 = vector.multi_reduction <maximumf>, %37, %cst_18 [2] : vector<4x8x8xf32> to vector<4x8xf32>
    %39 = vector.shape_cast %38 : vector<4x8xf32> to vector<4x8x1xf32>
    %40 = vector.broadcast %39 : vector<4x8x1xf32> to vector<4x8x8xf32>
    %41 = arith.subf %37, %40 : vector<4x8x8xf32>
    %42 = math.exp %41 : vector<4x8x8xf32>
    %cst_19 = arith.constant dense<0.000000e+00> : vector<4x8xf32>
    %43 = vector.multi_reduction <add>, %42, %cst_19 [2] : vector<4x8x8xf32> to vector<4x8xf32>
    %44 = vector.shape_cast %43 : vector<4x8xf32> to vector<4x8x1xf32>
    %45 = tpu.reciprocal %44 {approx = true} : vector<4x8x1xf32> -> vector<4x8x1xf32>
    %46 = vector.broadcast %45 : vector<4x8x1xf32> to vector<4x8x8xf32>
    %47 = arith.mulf %42, %46 : vector<4x8x8xf32>
    %cst_20 = arith.constant dense<0.000000e+00> : vector<4x8x8xf32>
    %48 = tpu.matmul %47, %36, %cst_20 {dimension_numbers = #tpu.dot_dimension_numbers<[2], [1], [1], [2], [0, 0, 0, 1, 1, 2], [0], [0]>} : vector<4x8x8xf32>, vector<4x8x8xf32>, vector<4x8x8xf32> -> vector<4x8x8xf32>
    %c0_21 = arith.constant 0 : index
    %c0_22 = arith.constant 0 : index
    %c0_23 = arith.constant 0 : index
    %49 = vector.load %arg6[%c0_21, %c0_22, %c0_23] : memref<4x8x32xf32, #tpu.memory_space<vmem>>, vector<4x8x32xf32>
    %cst_24 = arith.constant dense<0.000000e+00> : vector<4x8x32xf32>
    %50 = tpu.matmul %48, %49, %cst_24 {dimension_numbers = #tpu.dot_dimension_numbers<[2], [1], [1], [2], [0, 0, 0, 1, 1, 2], [0], [0]>} : vector<4x8x8xf32>, vector<4x8x32xf32>, vector<4x8x32xf32> -> vector<4x8x32xf32>
    %cst_25 = arith.constant dense<0.000000e+00> : vector<8x32xf32>
    %51 = vector.multi_reduction <add>, %50, %cst_25 [0] : vector<4x8x32xf32> to vector<8x32xf32>
    %c0_26 = arith.constant 0 : index
    %c0_27 = arith.constant 0 : index
    %52 = vector.load %arg7[%c0_26, %c0_27] : memref<1x32xf32, #tpu.memory_space<vmem>>, vector<1x32xf32>
    %53 = vector.broadcast %52 : vector<1x32xf32> to vector<8x32xf32>
    %54 = arith.addf %51, %53 : vector<8x32xf32>
    %55 = arith.addf %1, %54 : vector<8x32xf32>
    %c0_28 = arith.constant 0 : index
    %c0_29 = arith.constant 0 : index
    %c0_30 = arith.constant 0 : index
    %56 = vector.load %arg8[%c0_28, %c0_29, %c0_30] : memref<1x8x32xf32, #tpu.memory_space<vmem>>, vector<1x8x32xf32>
    %57 = vector.shape_cast %56 : vector<1x8x32xf32> to vector<8x32xf32>
    %58 = vector.shape_cast %55 : vector<8x32xf32> to vector<1x8x32xf32>
    tpu.vector_store %arg8[%c0_28, %c0_29, %c0_30], %58 {strides = array<i32>} : memref<1x8x32xf32, #tpu.memory_space<vmem>>, vector<1x8x32xf32>,
    return
  }
  func.func @transform_0(%arg0: i32) -> (i32, i32, i32) {
    %c0_i32 = arith.constant 0 : i32
    %c0_i32_0 = arith.constant 0 : i32
    %c0_i32_1 = arith.constant 0 : i32
    return %arg0, %c0_i32, %c0_i32_0 : i32, i32, i32
  }
  func.func @transform_1(%arg0: i32) -> (i32, i32) {
    %c0_i32 = arith.constant 0 : i32
    %c0_i32_0 = arith.constant 0 : i32
    %c0_i32_1 = arith.constant 0 : i32
    return %c0_i32, %c0_i32_0 : i32, i32
  }
  func.func @transform_2(%arg0: i32) -> (i32, i32) {
    %c0_i32 = arith.constant 0 : i32
    %c0_i32_0 = arith.constant 0 : i32
    %c0_i32_1 = arith.constant 0 : i32
    return %c0_i32, %c0_i32_0 : i32, i32
  }
  func.func @transform_3(%arg0: i32) -> (i32, i32, i32) {
    %c0_i32 = arith.constant 0 : i32
    %c0_i32_0 = arith.constant 0 : i32
    %c0_i32_1 = arith.constant 0 : i32
    %c0_i32_2 = arith.constant 0 : i32
    return %c0_i32, %c0_i32_0, %c0_i32_1 : i32, i32, i32
  }
  func.func @transform_4(%arg0: i32) -> (i32, i32, i32) {
    %c0_i32 = arith.constant 0 : i32
    %c0_i32_0 = arith.constant 0 : i32
    %c0_i32_1 = arith.constant 0 : i32
    %c0_i32_2 = arith.constant 0 : i32
    return %c0_i32, %c0_i32_0, %c0_i32_1 : i32, i32, i32
  }
  func.func @transform_5(%arg0: i32) -> (i32, i32, i32) {
    %c0_i32 = arith.constant 0 : i32
    %c0_i32_0 = arith.constant 0 : i32
    %c0_i32_1 = arith.constant 0 : i32
    %c0_i32_2 = arith.constant 0 : i32
    return %c0_i32, %c0_i32_0, %c0_i32_1 : i32, i32, i32
  }
  func.func @transform_6(%arg0: i32) -> (i32, i32) {
    %c0_i32 = arith.constant 0 : i32
    %c0_i32_0 = arith.constant 0 : i32
    %c0_i32_1 = arith.constant 0 : i32
    return %c0_i32, %c0_i32_0 : i32, i32
  }
  func.func @transform_7(%arg0: i32) -> (i32, i32, i32) {
    %c0_i32 = arith.constant 0 : i32
    %c0_i32_0 = arith.constant 0 : i32
    %c0_i32_1 = arith.constant 0 : i32
    return %arg0, %c0_i32, %c0_i32_0 : i32, i32, i32
  }
}

</mosaic_0001>

<llo_original>
// kernel: tpu_custom_call.1
$region0: #{tpu_custom_call.1}
  #allocation0 [shape = 'u32[]', space=smem, size = 0x4, offset = 0x4, fixed_abs, tag = 'smem constant byte address 0x4 - core index']
  #allocation1 [shape = 'u32[144,128]{1,0:T(1,128)}', space=vmem, size = 0x12000, scoped, tag = 'internal scratch']
  %s0 = inlined_call_operand.vmem [shape: f32[2,8,32], index: 0, kind: input, shape index: {}]
  %s1 = inlined_call_operand.vmem [shape: f32[1,32], index: 1, kind: input, shape index: {}]
  %s2 = inlined_call_operand.vmem [shape: f32[1,32], index: 2, kind: input, shape index: {}]
  %s3 = inlined_call_operand.vmem [shape: f32[4,32,24], index: 3, kind: input, shape index: {}]
  %s4 = inlined_call_operand.vmem [shape: f32[4,1,24], index: 4, kind: input, shape index: {}]
  %s5 = inlined_call_operand.vmem [shape: f32[4,8,32], index: 5, kind: input, shape index: {}]
  %s6 = inlined_call_operand.vmem [shape: f32[1,32], index: 6, kind: input, shape index: {}]
  %s7 = inlined_call_operand.hbm [shape: f32[2,8,32], index: 7, kind: output, shape index: {}]
  %s8 = sld [smem:[#allocation0]]
  $region61: #{tpu_custom_call.1} parent=0
    _
  %s10 = ssub.s32 1, %s8
  %s11 = scalar_select 0, %s10, %s8
  $region1: #{tpu_custom_call.1} parent=0
    #allocation2 [shape = 'u8[8192]{0}', space=vmem, size = 0x2000, scoped, tag = 'output window, operand 0']
    #allocation3 [shape = 's32[2]{0}', space=sflag, size = 0x8, scoped, tag = 'scoped memory for tpu_custom_call.1']
    %12 = vsyncpa [#allocation3], 0
    %s13 = scalar_lea.sflag [#allocation3], 1
    %14 = vsyncpa %s13, 0
    loop: start=0, step=1, limit=4
    $region2: #{tpu_custom_call.1} parent=1 // loop_pre_header
      _
    $region3: #{tpu_custom_call.1} parent=1 // loop_header
      %s16 = sphi 0, %s20
      %p17 = scmp.ge.s32.totalorder %s16, 4
      %s26 = sphi 0, %s28
      %s29 = sphi 0, %s26
      %s30 = sphi 0, %s29
      %s46 = sphi 0, %s30
      %s50 = sphi 0, %s50
      %s52 = sphi 0, %s50
      %s53 = sphi 0, %s52
      %s67 = sphi 0, %s53
      %s71 = sphi 0, %s71
      %s73 = sphi 0, %s71
      %s74 = sphi 0, %s73
      %s88 = sphi 0, %s74
      %s92 = sphi 0, %s92
      %s94 = sphi 0, %s92
      %s95 = sphi 0, %s94
      %s109 = sphi 0, %s95
      %s113 = sphi 0, %s113
      %s115 = sphi 0, %s113
      %s116 = sphi 0, %s115
      %s130 = sphi 0, %s116
      %s134 = sphi 0, %s134
      %s136 = sphi 0, %s134
      %s137 = sphi 0, %s136
      %s151 = sphi 0, %s137
      %s155 = sphi 0, %s155
      %s157 = sphi 0, %s155
      %s158 = sphi 0, %s157
      %s172 = sphi 0, %s158
      %s178 = sphi 0, %s180
      %s181 = sphi 0, %s178
      %s182 = sphi 0, %s181
      %s198 = sphi 0, %s182
    $region4: #{tpu_custom_call.1} parent=1 // loop_header_branch
      %19 = sbr.rel (%p17) target = $region8
    $region5: #{tpu_custom_call.1} parent=1 // loop_body
      %s21 = ssub.s32 %s16, 1
      %s22 = ssub.s32 %s16, 2
      %s23 = sadd.s32 %s16, 1
      %s24 = ssub.s32 %s16, %s23
      %p25 = scmp.eq.s32.totalorder %s24, 0
      %s27 = sadd.s32 %s26, 1
      %s28 = scalar_select %p25, %s26, %s27
      %p31 = pneg %p25
      %p32 = scmp.eq.s32.totalorder %s16, 1
      %p33 = por %p31, %p32
      %p34 = scmp.ne.s32.totalorder %s26, %s29
      %p35 = scmp.eq.s32.totalorder %s16, 0
      %p36 = por %p34, %p35
      %p37 = scmp.ne.s32.totalorder %s26, %s29
      %p38 = scmp.eq.s32.totalorder %s21, 1
      %p39 = por %p37, %p38
      %p40 = scmp.ne.s32.totalorder %s29, %s30
      %p41 = scmp.eq.s32.totalorder %s21, 0
      %p42 = por %p40, %p41
      %p43 = scmp.ne.s32.totalorder %s29, %s30
      %p44 = scmp.eq.s32.totalorder %s22, 1
      %p45 = por %p43, %p44
      %p47 = scmp.ne.s32.totalorder %s30, %s46
      %p48 = scmp.eq.s32.totalorder %s22, 0
      %p49 = por %p47, %p48
      %s51 = sadd.s32 %s50, 1
      %p54 = scmp.eq.s32.totalorder %s16, 1
      %p55 = scmp.ne.s32.totalorder %s50, %s52
      %p56 = scmp.eq.s32.totalorder %s16, 0
      %p57 = por %p55, %p56
      %p58 = scmp.ne.s32.totalorder %s50, %s52
      %p59 = scmp.eq.s32.totalorder %s21, 1
      %p60 = por %p58, %p59
      %p61 = scmp.ne.s32.totalorder %s52, %s53
      %p62 = scmp.eq.s32.totalorder %s21, 0
      %p63 = por %p61, %p62
      %p64 = scmp.ne.s32.totalorder %s52, %s53
      %p65 = scmp.eq.s32.totalorder %s22, 1
      %p66 = por %p64, %p65
      %p68 = scmp.ne.s32.totalorder %s53, %s67
      %p69 = scmp.eq.s32.totalorder %s22, 0
      %p70 = por %p68, %p69
      %s72 = sadd.s32 %s71, 1
      %p75 = scmp.eq.s32.totalorder %s16, 1
      %p76 = scmp.ne.s32.totalorder %s71, %s73
      %p77 = scmp.eq.s32.totalorder %s16, 0
      %p78 = por %p76, %p77
      %p79 = scmp.ne.s32.totalorder %s71, %s73
      %p80 = scmp.eq.s32.totalorder %s21, 1
      %p81 = por %p79, %p80
      %p82 = scmp.ne.s32.totalorder %s73, %s74
      %p83 = scmp.eq.s32.totalorder %s21, 0
      %p84 = por %p82, %p83
      %p85 = scmp.ne.s32.totalorder %s73, %s74
      %p86 = scmp.eq.s32.totalorder %s22, 1
      %p87 = por %p85, %p86
      %p89 = scmp.ne.s32.totalorder %s74, %s88
      %p90 = scmp.eq.s32.totalorder %s22, 0
      %p91 = por %p89, %p90
      %s93 = sadd.s32 %s92, 1
      %p96 = scmp.eq.s32.totalorder %s16, 1
      %p97 = scmp.ne.s32.totalorder %s92, %s94
      %p98 = scmp.eq.s32.totalorder %s16, 0
      %p99 = por %p97, %p98
      %p100 = scmp.ne.s32.totalorder %s92, %s94
      %p101 = scmp.eq.s32.totalorder %s21, 1
      %p102 = por %p100, %p101
      %p103 = scmp.ne.s32.totalorder %s94, %s95
      %p104 = scmp.eq.s32.totalorder %s21, 0
      %p105 = por %p103, %p104
      %p106 = scmp.ne.s32.totalorder %s94, %s95
      %p107 = scmp.eq.s32.totalorder %s22, 1
      %p108 = por %p106, %p107
      %p110 = scmp.ne.s32.totalorder %s95, %s109
      %p111 = scmp.eq.s32.totalorder %s22, 0
      %p112 = por %p110, %p111
      %s114 = sadd.s32 %s113, 1
      %p117 = scmp.eq.s32.totalorder %s16, 1
      %p118 = scmp.ne.s32.totalorder %s113, %s115
      %p119 = scmp.eq.s32.totalorder %s16, 0
      %p120 = por %p118, %p119
      %p121 = scmp.ne.s32.totalorder %s113, %s115
      %p122 = scmp.eq.s32.totalorder %s21, 1
      %p123 = por %p121, %p122
      %p124 = scmp.ne.s32.totalorder %s115, %s116
      %p125 = scmp.eq.s32.totalorder %s21, 0
      %p126 = por %p124, %p125
      %p127 = scmp.ne.s32.totalorder %s115, %s116
      %p128 = scmp.eq.s32.totalorder %s22, 1
      %p129 = por %p127, %p128
      %p131 = scmp.ne.s32.totalorder %s116, %s130
      %p132 = scmp.eq.s32.totalorder %s22, 0
      %p133 = por %p131, %p132
      %s135 = sadd.s32 %s134, 1
      %p138 = scmp.eq.s32.totalorder %s16, 1
      %p139 = scmp.ne.s32.totalorder %s134, %s136
      %p140 = scmp.eq.s32.totalorder %s16, 0
      %p141 = por %p139, %p140
      %p142 = scmp.ne.s32.totalorder %s134, %s136
      %p143 = scmp.eq.s32.totalorder %s21, 1
      %p144 = por %p142, %p143
      %p145 = scmp.ne.s32.totalorder %s136, %s137
      %p146 = scmp.eq.s32.totalorder %s21, 0
      %p147 = por %p145, %p146
      %p148 = scmp.ne.s32.totalorder %s136, %s137
      %p149 = scmp.eq.s32.totalorder %s22, 1
      %p150 = por %p148, %p149
      %p152 = scmp.ne.s32.totalorder %s137, %s151
      %p153 = scmp.eq.s32.totalorder %s22, 0
      %p154 = por %p152, %p153
      %s156 = sadd.s32 %s155, 1
      %p159 = scmp.eq.s32.totalorder %s16, 1
      %p160 = scmp.ne.s32.totalorder %s155, %s157
      %p161 = scmp.eq.s32.totalorder %s16, 0
      %p162 = por %p160, %p161
      %p163 = scmp.ne.s32.totalorder %s155, %s157
      %p164 = scmp.eq.s32.totalorder %s21, 1
      %p165 = por %p163, %p164
      %p166 = scmp.ne.s32.totalorder %s157, %s158
      %p167 = scmp.eq.s32.totalorder %s21, 0
      %p168 = por %p166, %p167
      %p169 = scmp.ne.s32.totalorder %s157, %s158
      %p170 = scmp.eq.s32.totalorder %s22, 1
      %p171 = por %p169, %p170
      %p173 = scmp.ne.s32.totalorder %s158, %s172
      %p174 = scmp.eq.s32.totalorder %s22, 0
      %p175 = por %p173, %p174
      %s176 = ssub.s32 %s16, %s23
      %p177 = scmp.eq.s32.totalorder %s176, 0
      %s179 = sadd.s32 %s178, 1
      %s180 = scalar_select %p177, %s178, %s179
      %p183 = pneg %p177
      %p184 = scmp.eq.s32.totalorder %s16, 1
      %p185 = por %p183, %p184
      %p186 = scmp.ne.s32.totalorder %s178, %s181
      %p187 = scmp.eq.s32.totalorder %s16, 0
      %p188 = por %p186, %p187
      %p189 = scmp.ne.s32.totalorder %s178, %s181
      %p190 = scmp.eq.s32.totalorder %s21, 1
      %p191 = por %p189, %p190
      %p192 = scmp.ne.s32.totalorder %s181, %s182
      %p193 = scmp.eq.s32.totalorder %s21, 0
      %p194 = por %p192, %p193
      %p195 = scmp.ne.s32.totalorder %s181, %s182
      %p196 = scmp.eq.s32.totalorder %s22, 1
      %p197 = por %p195, %p196
      %p199 = scmp.ne.s32.totalorder %s182, %s198
      %p200 = scmp.eq.s32.totalorder %s22, 0
      %p201 = por %p199, %p200
      %p202 = scmp.le.s32.totalorder 1, %s16
      %p203 = scmp.lt.s32.totalorder %s16, 3
      %p204 = pnand %p202, %p203
      %p205 = pneg %p204
      // Predicated region
      $region9: #{tpu_custom_call.1} parent=5 // pred_check
        _
      $region10: #{tpu_custom_call.1} parent=5 // pred_check_branch
        %207 = sbr.rel (%p204) target = $region12
      $region11: #{tpu_custom_call.1} parent=5 // pred_region
        %s208 = ssub.s32 %s16, 1
        // Predicated region
        $region13: #{tpu_custom_call.1} parent=11 // pred_check
          %p209 = pneg %p63
        $region14: #{tpu_custom_call.1} parent=11 // pred_check_branch
          %211 = sbr.rel (%p209) target = $region16
        $region15: #{tpu_custom_call.1} parent=11 // pred_region
          _
        $region16: #{tpu_custom_call.1} parent=11 // pred_fallthru
          _
        // Predicated region
        $region17: #{tpu_custom_call.1} parent=11 // pred_check
          %p212 = pneg %p84
        $region18: #{tpu_custom_call.1} parent=11 // pred_check_branch
          %214 = sbr.rel (%p212) target = $region20
        $region19: #{tpu_custom_call.1} parent=11 // pred_region
          _
        $region20: #{tpu_custom_call.1} parent=11 // pred_fallthru
          _
        // Predicated region
        $region21: #{tpu_custom_call.1} parent=11 // pred_check
          %p215 = pneg %p105
        $region22: #{tpu_custom_call.1} parent=11 // pred_check_branch
          %217 = sbr.rel (%p215) target = $region24
        $region23: #{tpu_custom_call.1} parent=11 // pred_region
          _
        $region24: #{tpu_custom_call.1} parent=11 // pred_fallthru
          _
        // Predicated region
        $region25: #{tpu_custom_call.1} parent=11 // pred_check
          %p218 = pneg %p126
        $region26: #{tpu_custom_call.1} parent=11 // pred_check_branch
          %220 = sbr.rel (%p218) target = $region28
        $region27: #{tpu_custom_call.1} parent=11 // pred_region
          _
        $region28: #{tpu_custom_call.1} parent=11 // pred_fallthru
          _
        // Predicated region
        $region29: #{tpu_custom_call.1} parent=11 // pred_check
          %p221 = pneg %p147
        $region30: #{tpu_custom_call.1} parent=11 // pred_check_branch
          %223 = sbr.rel (%p221) target = $region32
        $region31: #{tpu_custom_call.1} parent=11 // pred_region
          _
        $region32: #{tpu_custom_call.1} parent=11 // pred_fallthru
          _
        // Predicated region
        $region33: #{tpu_custom_call.1} parent=11 // pred_check
          %p224 = pneg %p168
        $region34: #{tpu_custom_call.1} parent=11 // pred_check_branch
          %226 = sbr.rel (%p224) target = $region36
        $region35: #{tpu_custom_call.1} parent=11 // pred_region
          _
        $region36: #{tpu_custom_call.1} parent=11 // pred_fallthru
          _
      $region12: #{tpu_custom_call.1} parent=5 // pred_fallthru
        _
      %p227 = scmp.lt.s32.totalorder %s16, 2
      // Predicated region
      $region37: #{tpu_custom_call.1} parent=5 // pred_check
        %p228 = pneg %p227
      $region38: #{tpu_custom_call.1} parent=5 // pred_check_branch
        %230 = sbr.rel (%p228) target = $region40
      $region39: #{tpu_custom_call.1} parent=5 // pred_region
        // Predicated region
        $region41: #{tpu_custom_call.1} parent=39 // pred_check
          %p231 = pneg %p36
        $region42: #{tpu_custom_call.1} parent=39 // pred_check_branch
          %233 = sbr.rel (%p231) target = $region44
        $region43: #{tpu_custom_call.1} parent=39 // pred_region
          %p234 = scmp.lt.s32.totalorder %s16, 1
          %s235 = scalar_select %p234, %s16, 1
          %s236 = smul.addr %s235, 8
          %s237 = scalar_lea.vmem %s0, %s236
        $region44: #{tpu_custom_call.1} parent=39 // pred_fallthru
          _
      $region40: #{tpu_custom_call.1} parent=5 // pred_fallthru
        _
      %p238 = scmp.le.s32.totalorder 1, %s16
      %p239 = scmp.lt.s32.totalorder %s16, 3
      %p240 = pnand %p238, %p239
      %p241 = pneg %p240
      // Predicated region
      $region45: #{tpu_custom_call.1} parent=5 // pred_check
        _
      $region46: #{tpu_custom_call.1} parent=5 // pred_check_branch
        %243 = sbr.rel (%p240) target = $region48
      $region47: #{tpu_custom_call.1} parent=5 // pred_region
        %s244 = ssub.s32 %s16, 1
        %p245 = scmp.lt.s32.totalorder %s21, 1
        %s246 = scalar_select %p245, %s21, 1
        %s247 = smul.addr %s246, 8
        %s248 = scalar_lea.vmem %s0, %s247
        %p249 = pneg %p42
        %p250 = pneg %p39
        %p251 = pneg %p63
        %p252 = pneg %p60
        %p253 = pneg %p84
        %p254 = pneg %p81
        %p255 = pneg %p105
        %p256 = pneg %p102
        %p257 = pneg %p126
        %p258 = pneg %p123
        %p259 = pneg %p147
        %p260 = pneg %p144
        %p261 = pneg %p168
        %p262 = pneg %p165
        %p263 = pneg %p194
        %p264 = pneg %p191
        %s265 = sand.u32 %s181, 1
        %s266 = scalar_lea.sflag [#allocation3], %s265
        %s267 = sand.u32 %s181, 1
        %s268 = smul.addr %s267, 8
        %s269 = scalar_lea.vmem [#allocation2], %s268
        %p270 = scmp.lt.s32.totalorder %s21, 1
        %s271 = scalar_select %p270, %s21, 1
        %s272 = smul.addr %s271, 8
        %s273 = scalar_lea.vmem %s0, %s272
        %v274 = vld [vmem:[%s273] sm:$0xff]
        %vm275 = vcmask 261120
        %v276 = vsel %vm275, %v274, 0.0
        %277 = vadd.xlane.f32.xlu0 %v276
        %v278 = vpop.xlane.xlu0 %277
        %v279 = vrcp.pop 32.0
        %v280 = vmul.f32 %v278, %v279
        %v281 = vsub.f32 %v274, %v280
        %v282 = vmul.f32 %v281, %v281
        %v283 = vsel %vm275, %v282, 0.0
        %284 = vadd.xlane.f32.xlu0 %v283
        %v285 = vpop.xlane.xlu0 %284
        %v286 = vmul.f32 %v285, %v279
        %v287 = vadd.f32 %v286, 1e-05
        %v288 = vrsqrt.pop %v287
        %v289 = vmul.f32 %v281, %v288
        %v290 = vld [vmem:[%s1] sm:$0x1]
        %v292 = vlaneseq
        %v293 = vshrl.u32 %v292, 7
        %v294 = vsub.s32 0, %v293
        %v295 = vrot.slane %v290, %v294
        %v297 = vmul.f32 %v289, %v295
        %v298 = vld [vmem:[%s2] sm:$0x1]
        %v300 = vlaneseq
        %v301 = vshrl.u32 %v300, 7
        %v302 = vsub.s32 0, %v301
        %v303 = vrot.slane %v298, %v302
        %v305 = vadd.f32 %v297, %v303
        %v306 = vld [vmem:[%s3] sm:$0xff]
        %v307 = vld [vmem:[%s3 + $0x8] sm:$0xff]
        %v308 = vld [vmem:[%s3 + $0x10] sm:$0xff]
        %v309 = vld [vmem:[%s3 + $0x18] sm:$0xff]
        %v310 = vld [vmem:[%s3 + $0x20] sm:$0xff]
        %v311 = vld [vmem:[%s3 + $0x28] sm:$0xff]
        %v312 = vld [vmem:[%s3 + $0x30] sm:$0xff]
        %v313 = vld [vmem:[%s3 + $0x38] sm:$0xff]
        %v314 = vld [vmem:[%s3 + $0x40] sm:$0xff]
        %v315 = vld [vmem:[%s3 + $0x48] sm:$0xff]
        %v316 = vld [vmem:[%s3 + $0x50] sm:$0xff]
        %v317 = vld [vmem:[%s3 + $0x58] sm:$0xff]
        %v318 = vld [vmem:[%s3 + $0x60] sm:$0xff]
        %v319 = vld [vmem:[%s3 + $0x68] sm:$0xff]
        %v320 = vld [vmem:[%s3 + $0x70] sm:$0xff]
        %v321 = vld [vmem:[%s3 + $0x78] sm:$0xff]
        %v322 = vld [vmem:[%s4] sm:$0x1]
        %v323 = vld [vmem:[%s4 + $0x1] sm:$0x1]
        %v324 = vld [vmem:[%s4 + $0x2] sm:$0x1]
        %v325 = vld [vmem:[%s4 + $0x3] sm:$0x1]
        %v330 = vlaneseq
        %v331 = vshrl.u32 %v330, 7
        %v332 = vsub.s32 0, %v331
        %v333 = vrot.slane %v322, %v332
        %v334 = vlaneseq
        %v335 = vshrl.u32 %v334, 7
        %v336 = vsub.s32 0, %v335
        %v337 = vrot.slane %v323, %v336
        %v338 = vlaneseq
        %v339 = vshrl.u32 %v338, 7
        %v340 = vsub.s32 0, %v339
        %v341 = vrot.slane %v324, %v340
        %v342 = vlaneseq
        %v343 = vshrl.u32 %v342, 7
        %v344 = vsub.s32 0, %v343
        %v345 = vrot.slane %v325, %v344
        %v351 = vsel %vm275, %v305, 0
        %353 = vmatprep.subr.mxu0 0.0
        %354 = vmatpush1.msra.mxu0 0.0
        %355 = vmatprep.subr.mxu0 0.0
        %356 = vmatpush1.msra.mxu0 0.0
        %357 = vmatprep.subr.mxu0 0.0
        %358 = vmatpush1.msra.mxu0 0.0
        %359 = vmatprep.subr.mxu0 0.0
        %360 = vmatpush1.msra.mxu0 0.0
        %361 = vmatprep.subr.mxu0 0.0
        %362 = vmatpush1.msra.mxu0 0.0
        %363 = vmatprep.subr.mxu0 0.0
        %364 = vmatpush1.msra.mxu0 0.0
        %365 = vmatprep.subr.mxu0 0.0
        %366 = vmatpush1.msra.mxu0 0.0
        %367 = vmatprep.subr.mxu0 0.0
        %368 = vmatpush1.msra.mxu0 0.0
        %369 = vmatprep.subr.mxu0 0.0
        %370 = vmatpush1.msra.mxu0 0.0
        %371 = vmatprep.subr.mxu0 0.0
        %372 = vmatpush1.msra.mxu0 0.0
        %373 = vmatprep.subr.mxu0 0.0
        %374 = vmatpush1.msra.mxu0 0.0
        %375 = vmatprep.subr.mxu0 0.0
        %376 = vmatpush1.msra.mxu0 0.0
        %377 = vmatprep.subr.mxu0 0.0
        %378 = vmatpush1.msra.mxu0 %v309
        %379 = vmatprep.subr.mxu0 0.0
        %380 = vmatpush1.msra.mxu0 %v308
        %381 = vmatprep.subr.mxu0 0.0
        %382 = vmatpush1.msra.mxu0 %v307
        %383 = vmatprep.subr.mxu0 0.0
        %384 = vmatpush1.msra.mxu0 %v306
        %385 = vmatprep.subr.mxu0 0.0
        %386 = vmatpush2.msra.mxu0 0.0
        %387 = vmatprep.subr.mxu0 0.0
        %388 = vmatpush2.msra.mxu0 0.0
        %389 = vmatprep.subr.mxu0 0.0
        %390 = vmatpush2.msra.mxu0 0.0
        %391 = vmatprep.subr.mxu0 0.0
        %392 = vmatpush2.msra.mxu0 0.0
        %393 = vmatprep.subr.mxu0 0.0
        %394 = vmatpush2.msra.mxu0 0.0
        %395 = vmatprep.subr.mxu0 0.0
        %396 = vmatpush2.msra.mxu0 0.0
        %397 = vmatprep.subr.mxu0 0.0
        %398 = vmatpush2.msra.mxu0 0.0
        %399 = vmatprep.subr.mxu0 0.0
        %400 = vmatpush2.msra.mxu0 0.0
        %401 = vmatprep.subr.mxu0 0.0
        %402 = vmatpush2.msra.mxu0 0.0
        %403 = vmatprep.subr.mxu0 0.0
        %404 = vmatpush2.msra.mxu0 0.0
        %405 = vmatprep.subr.mxu0 0.0
        %406 = vmatpush2.msra.mxu0 0.0
        %407 = vmatprep.subr.mxu0 0.0
        %408 = vmatpush2.msra.mxu0 0.0
        %409 = vmatprep.subr.mxu0 0.0
        %410 = vmatpush2.msra.mxu0 0.0
        %411 = vmatprep.subr.mxu0 0.0
        %412 = vmatpush2.msra.mxu0 0.0
        %413 = vmatprep.subr.mxu0 0.0
        %414 = vmatpush2.msra.mxu0 0.0
        %415 = vmatprep.subr.mxu0 0.0
        %416 = vmatpush2.msra.mxu0 0.0
        %417 = vmatprep.mubr.f32.mxu0 0.0
        %418 = vmatmul.mubr.f32.gmra.mxu0 %v351
        %v419 = vpop.f32.mrf.mxu0
        %v420 = vadd.f32 %v333, %v419
        %v421 = vpop.f32.mrf.mxu0
        %422 = vdwg.mxu0
        %423 = vmatprep.subr.mxu0 0.0
        %424 = vmatpush1.msra.mxu0 0.0
        %425 = vmatprep.subr.mxu0 0.0
        %426 = vmatpush1.msra.mxu0 0.0
        %427 = vmatprep.subr.mxu0 0.0
        %428 = vmatpush1.msra.mxu0 0.0
        %429 = vmatprep.subr.mxu0 0.0
        %430 = vmatpush1.msra.mxu0 0.0
        %431 = vmatprep.subr.mxu0 0.0
        %432 = vmatpush1.msra.mxu0 0.0
        %433 = vmatprep.subr.mxu0 0.0
        %434 = vmatpush1.msra.mxu0 0.0
        %435 = vmatprep.subr.mxu0 0.0
        %436 = vmatpush1.msra.mxu0 0.0
        %437 = vmatprep.subr.mxu0 0.0
        %438 = vmatpush1.msra.mxu0 0.0
        %439 = vmatprep.subr.mxu0 0.0
        %440 = vmatpush1.msra.mxu0 0.0
        %441 = vmatprep.subr.mxu0 0.0
        %442 = vmatpush1.msra.mxu0 0.0
        %443 = vmatprep.subr.mxu0 0.0
        %444 = vmatpush1.msra.mxu0 0.0
        %445 = vmatprep.subr.mxu0 0.0
        %446 = vmatpush1.msra.mxu0 0.0
        %447 = vmatprep.subr.mxu0 0.0
        %448 = vmatpush1.msra.mxu0 %v313
        %449 = vmatprep.subr.mxu0 0.0
        %450 = vmatpush1.msra.mxu0 %v312
        %451 = vmatprep.subr.mxu0 0.0
        %452 = vmatpush1.msra.mxu0 %v311
        %453 = vmatprep.subr.mxu0 0.0
        %454 = vmatpush1.msra.mxu0 %v310
        %455 = vmatprep.subr.mxu0 0.0
        %456 = vmatpush2.msra.mxu0 0.0
        %457 = vmatprep.subr.mxu0 0.0
        %458 = vmatpush2.msra.mxu0 0.0
        %459 = vmatprep.subr.mxu0 0.0
        %460 = vmatpush2.msra.mxu0 0.0
        %461 = vmatprep.subr.mxu0 0.0
        %462 = vmatpush2.msra.mxu0 0.0
        %463 = vmatprep.subr.mxu0 0.0
        %464 = vmatpush2.msra.mxu0 0.0
        %465 = vmatprep.subr.mxu0 0.0
        %466 = vmatpush2.msra.mxu0 0.0
        %467 = vmatprep.subr.mxu0 0.0
        %468 = vmatpush2.msra.mxu0 0.0
        %469 = vmatprep.subr.mxu0 0.0
        %470 = vmatpush2.msra.mxu0 0.0
        %471 = vmatprep.subr.mxu0 0.0
        %472 = vmatpush2.msra.mxu0 0.0
        %473 = vmatprep.subr.mxu0 0.0
        %474 = vmatpush2.msra.mxu0 0.0
        %475 = vmatprep.subr.mxu0 0.0
        %476 = vmatpush2.msra.mxu0 0.0
        %477 = vmatprep.subr.mxu0 0.0
        %478 = vmatpush2.msra.mxu0 0.0
        %479 = vmatprep.subr.mxu0 0.0
        %480 = vmatpush2.msra.mxu0 0.0
        %481 = vmatprep.subr.mxu0 0.0
        %482 = vmatpush2.msra.mxu0 0.0
        %483 = vmatprep.subr.mxu0 0.0
        %484 = vmatpush2.msra.mxu0 0.0
        %485 = vmatprep.subr.mxu0 0.0
        %486 = vmatpush2.msra.mxu0 0.0
        %487 = vmatprep.mubr.f32.mxu0 0.0
        %488 = vmatmul.mubr.f32.gmra.mxu0 %v351
        %v489 = vpop.f32.mrf.mxu0
        %v490 = vadd.f32 %v337, %v489
        %v491 = vpop.f32.mrf.mxu0
        %492 = vdwg.mxu0
        %493 = vmatprep.subr.mxu0 0.0
        %494 = vmatpush1.msra.mxu0 0.0
        %495 = vmatprep.subr.mxu0 0.0
        %496 = vmatpush1.msra.mxu0 0.0
        %497 = vmatprep.subr.mxu0 0.0
        %498 = vmatpush1.msra.mxu0 0.0
        %499 = vmatprep.subr.mxu0 0.0
        %500 = vmatpush1.msra.mxu0 0.0
        %501 = vmatprep.subr.mxu0 0.0
        %502 = vmatpush1.msra.mxu0 0.0
        %503 = vmatprep.subr.mxu0 0.0
        %504 = vmatpush1.msra.mxu0 0.0
        %505 = vmatprep.subr.mxu0 0.0
        %506 = vmatpush1.msra.mxu0 0.0
        %507 = vmatprep.subr.mxu0 0.0
        %508 = vmatpush1.msra.mxu0 0.0
        %509 = vmatprep.subr.mxu0 0.0
        %510 = vmatpush1.msra.mxu0 0.0
        %511 = vmatprep.subr.mxu0 0.0
        %512 = vmatpush1.msra.mxu0 0.0
        %513 = vmatprep.subr.mxu0 0.0
        %514 = vmatpush1.msra.mxu0 0.0
        %515 = vmatprep.subr.mxu0 0.0
        %516 = vmatpush1.msra.mxu0 0.0
        %517 = vmatprep.subr.mxu0 0.0
        %518 = vmatpush1.msra.mxu0 %v317
        %519 = vmatprep.subr.mxu0 0.0
        %520 = vmatpush1.msra.mxu0 %v316
        %521 = vmatprep.subr.mxu0 0.0
        %522 = vmatpush1.msra.mxu0 %v315
        %523 = vmatprep.subr.mxu0 0.0
        %524 = vmatpush1.msra.mxu0 %v314
        %525 = vmatprep.subr.mxu0 0.0
        %526 = vmatpush2.msra.mxu0 0.0
        %527 = vmatprep.subr.mxu0 0.0
        %528 = vmatpush2.msra.mxu0 0.0
        %529 = vmatprep.subr.mxu0 0.0
        %530 = vmatpush2.msra.mxu0 0.0
        %531 = vmatprep.subr.mxu0 0.0
        %532 = vmatpush2.msra.mxu0 0.0
        %533 = vmatprep.subr.mxu0 0.0
        %534 = vmatpush2.msra.mxu0 0.0
        %535 = vmatprep.subr.mxu0 0.0
        %536 = vmatpush2.msra.mxu0 0.0
        %537 = vmatprep.subr.mxu0 0.0
        %538 = vmatpush2.msra.mxu0 0.0
        %539 = vmatprep.subr.mxu0 0.0
        %540 = vmatpush2.msra.mxu0 0.0
        %541 = vmatprep.subr.mxu0 0.0
        %542 = vmatpush2.msra.mxu0 0.0
        %543 = vmatprep.subr.mxu0 0.0
        %544 = vmatpush2.msra.mxu0 0.0
        %545 = vmatprep.subr.mxu0 0.0
        %546 = vmatpush2.msra.mxu0 0.0
        %547 = vmatprep.subr.mxu0 0.0
        %548 = vmatpush2.msra.mxu0 0.0
        %549 = vmatprep.subr.mxu0 0.0
        %550 = vmatpush2.msra.mxu0 0.0
        %551 = vmatprep.subr.mxu0 0.0
        %552 = vmatpush2.msra.mxu0 0.0
        %553 = vmatprep.subr.mxu0 0.0
        %554 = vmatpush2.msra.mxu0 0.0
        %555 = vmatprep.subr.mxu0 0.0
        %556 = vmatpush2.msra.mxu0 0.0
        %557 = vmatprep.mubr.f32.mxu0 0.0
        %558 = vmatmul.mubr.f32.gmra.mxu0 %v351
        %v559 = vpop.f32.mrf.mxu0
        %v560 = vadd.f32 %v341, %v559
        %v561 = vpop.f32.mrf.mxu0
        %562 = vdwg.mxu0
        %563 = vmatprep.subr.mxu0 0.0
        %564 = vmatpush1.msra.mxu0 0.0
        %565 = vmatprep.subr.mxu0 0.0
        %566 = vmatpush1.msra.mxu0 0.0
        %567 = vmatprep.subr.mxu0 0.0
        %568 = vmatpush1.msra.mxu0 0.0
        %569 = vmatprep.subr.mxu0 0.0
        %570 = vmatpush1.msra.mxu0 0.0
        %571 = vmatprep.subr.mxu0 0.0
        %572 = vmatpush1.msra.mxu0 0.0
        %573 = vmatprep.subr.mxu0 0.0
        %574 = vmatpush1.msra.mxu0 0.0
        %575 = vmatprep.subr.mxu0 0.0
        %576 = vmatpush1.msra.mxu0 0.0
        %577 = vmatprep.subr.mxu0 0.0
        %578 = vmatpush1.msra.mxu0 0.0
        %579 = vmatprep.subr.mxu0 0.0
        %580 = vmatpush1.msra.mxu0 0.0
        %581 = vmatprep.subr.mxu0 0.0
        %582 = vmatpush1.msra.mxu0 0.0
        %583 = vmatprep.subr.mxu0 0.0
        %584 = vmatpush1.msra.mxu0 0.0
        %585 = vmatprep.subr.mxu0 0.0
        %586 = vmatpush1.msra.mxu0 0.0
        %587 = vmatprep.subr.mxu0 0.0
        %588 = vmatpush1.msra.mxu0 %v321
        %589 = vmatprep.subr.mxu0 0.0
        %590 = vmatpush1.msra.mxu0 %v320
        %591 = vmatprep.subr.mxu0 0.0
        %592 = vmatpush1.msra.mxu0 %v319
        %593 = vmatprep.subr.mxu0 0.0
        %594 = vmatpush1.msra.mxu0 %v318
        %595 = vmatprep.subr.mxu0 0.0
        %596 = vmatpush2.msra.mxu0 0.0
        %597 = vmatprep.subr.mxu0 0.0
        %598 = vmatpush2.msra.mxu0 0.0
        %599 = vmatprep.subr.mxu0 0.0
        %600 = vmatpush2.msra.mxu0 0.0
        %601 = vmatprep.subr.mxu0 0.0
        %602 = vmatpush2.msra.mxu0 0.0
        %603 = vmatprep.subr.mxu0 0.0
        %604 = vmatpush2.msra.mxu0 0.0
        %605 = vmatprep.subr.mxu0 0.0
        %606 = vmatpush2.msra.mxu0 0.0
        %607 = vmatprep.subr.mxu0 0.0
        %608 = vmatpush2.msra.mxu0 0.0
        %609 = vmatprep.subr.mxu0 0.0
        %610 = vmatpush2.msra.mxu0 0.0
        %611 = vmatprep.subr.mxu0 0.0
        %612 = vmatpush2.msra.mxu0 0.0
        %613 = vmatprep.subr.mxu0 0.0
        %614 = vmatpush2.msra.mxu0 0.0
        %615 = vmatprep.subr.mxu0 0.0
        %616 = vmatpush2.msra.mxu0 0.0
        %617 = vmatprep.subr.mxu0 0.0
        %618 = vmatpush2.msra.mxu0 0.0
        %619 = vmatprep.subr.mxu0 0.0
        %620 = vmatpush2.msra.mxu0 0.0
        %621 = vmatprep.subr.mxu0 0.0
        %622 = vmatpush2.msra.mxu0 0.0
        %623 = vmatprep.subr.mxu0 0.0
        %624 = vmatpush2.msra.mxu0 0.0
        %625 = vmatprep.subr.mxu0 0.0
        %626 = vmatpush2.msra.mxu0 0.0
        %627 = vmatprep.mubr.f32.mxu0 0.0
        %628 = vmatmul.mubr.f32.gmra.mxu0 %v351
        %v629 = vpop.f32.mrf.mxu0
        %v630 = vadd.f32 %v345, %v629
        %v631 = vpop.f32.mrf.mxu0
        %632 = vdwg.mxu0
        %634 = vrot.lane.b32.xlu0 %v420, 120
        %v635 = vpop.permute.xlu0 %634
        %vm636 = vcmask 64512
        %v637 = vsel %vm636, %v420, 0
        %v639 = vsel %vm636, %v635, 0
        %641 = vmatprep.subr.mxu0 0.0
        %642 = vmatpush1.xpose.msra.mxu0 0.0
        %643 = vmatprep.subr.mxu0 0.0
        %644 = vmatpush1.xpose.msra.mxu0 0.0
        %645 = vmatprep.subr.mxu0 0.0
        %646 = vmatpush1.xpose.msra.mxu0 0.0
        %647 = vmatprep.subr.mxu0 0.0
        %648 = vmatpush1.xpose.msra.mxu0 0.0
        %649 = vmatprep.subr.mxu0 0.0
        %650 = vmatpush1.xpose.msra.mxu0 0.0
        %651 = vmatprep.subr.mxu0 0.0
        %652 = vmatpush1.xpose.msra.mxu0 0.0
        %653 = vmatprep.subr.mxu0 0.0
        %654 = vmatpush1.xpose.msra.mxu0 0.0
        %655 = vmatprep.subr.mxu0 0.0
        %656 = vmatpush1.xpose.msra.mxu0 0.0
        %657 = vmatprep.subr.mxu0 0.0
        %658 = vmatpush1.xpose.msra.mxu0 0.0
        %659 = vmatprep.subr.mxu0 0.0
        %660 = vmatpush1.xpose.msra.mxu0 0.0
        %661 = vmatprep.subr.mxu0 0.0
        %662 = vmatpush1.xpose.msra.mxu0 0.0
        %663 = vmatprep.subr.mxu0 0.0
        %664 = vmatpush1.xpose.msra.mxu0 0.0
        %665 = vmatprep.subr.mxu0 0.0
        %666 = vmatpush1.xpose.msra.mxu0 0.0
        %667 = vmatprep.subr.mxu0 0.0
        %668 = vmatpush1.xpose.msra.mxu0 0.0
        %669 = vmatprep.subr.mxu0 0.0
        %670 = vmatpush1.xpose.msra.mxu0 0.0
        %671 = vmatprep.subr.mxu0 0.0
        %672 = vmatpush1.xpose.msra.mxu0 %v639
        %673 = vmatprep.subr.mxu0 0.0
        %674 = vmatpush2.xpose.msra.mxu0 0.0
        %675 = vmatprep.subr.mxu0 0.0
        %676 = vmatpush2.xpose.msra.mxu0 0.0
        %677 = vmatprep.subr.mxu0 0.0
        %678 = vmatpush2.xpose.msra.mxu0 0.0
        %679 = vmatprep.subr.mxu0 0.0
        %680 = vmatpush2.xpose.msra.mxu0 0.0
        %681 = vmatprep.subr.mxu0 0.0
        %682 = vmatpush2.xpose.msra.mxu0 0.0
        %683 = vmatprep.subr.mxu0 0.0
        %684 = vmatpush2.xpose.msra.mxu0 0.0
        %685 = vmatprep.subr.mxu0 0.0
        %686 = vmatpush2.xpose.msra.mxu0 0.0
        %687 = vmatprep.subr.mxu0 0.0
        %688 = vmatpush2.xpose.msra.mxu0 0.0
        %689 = vmatprep.subr.mxu0 0.0
        %690 = vmatpush2.xpose.msra.mxu0 0.0
        %691 = vmatprep.subr.mxu0 0.0
        %692 = vmatpush2.xpose.msra.mxu0 0.0
        %693 = vmatprep.subr.mxu0 0.0
        %694 = vmatpush2.xpose.msra.mxu0 0.0
        %695 = vmatprep.subr.mxu0 0.0
        %696 = vmatpush2.xpose.msra.mxu0 0.0
        %697 = vmatprep.subr.mxu0 0.0
        %698 = vmatpush2.xpose.msra.mxu0 0.0
        %699 = vmatprep.subr.mxu0 0.0
        %700 = vmatpush2.xpose.msra.mxu0 0.0
        %701 = vmatprep.subr.mxu0 0.0
        %702 = vmatpush2.xpose.msra.mxu0 0.0
        %703 = vmatprep.subr.mxu0 0.0
        %704 = vmatpush2.xpose.msra.mxu0 0.0
        %705 = vmatprep.mubr.f32.mxu0 0.0
        %706 = vmatmul.mubr.f32.gmra.mxu0 %v637
        %v707 = vpop.f32.mrf.mxu0
        %v708 = vadd.f32 0.0, %v707
        %v709 = vpop.f32.mrf.mxu0
        %710 = vdwg.mxu0
        %712 = vrot.lane.b32.xlu0 %v490, 120
        %v713 = vpop.permute.xlu0 %712
        %v714 = vsel %vm636, %v490, 0
        %v716 = vsel %vm636, %v713, 0
        %718 = vmatprep.subr.mxu0 0.0
        %719 = vmatpush1.xpose.msra.mxu0 0.0
        %720 = vmatprep.subr.mxu0 0.0
        %721 = vmatpush1.xpose.msra.mxu0 0.0
        %722 = vmatprep.subr.mxu0 0.0
        %723 = vmatpush1.xpose.msra.mxu0 0.0
        %724 = vmatprep.subr.mxu0 0.0
        %725 = vmatpush1.xpose.msra.mxu0 0.0
        %726 = vmatprep.subr.mxu0 0.0
        %727 = vmatpush1.xpose.msra.mxu0 0.0
        %728 = vmatprep.subr.mxu0 0.0
        %729 = vmatpush1.xpose.msra.mxu0 0.0
        %730 = vmatprep.subr.mxu0 0.0
        %731 = vmatpush1.xpose.msra.mxu0 0.0
        %732 = vmatprep.subr.mxu0 0.0
        %733 = vmatpush1.xpose.msra.mxu0 0.0
        %734 = vmatprep.subr.mxu0 0.0
        %735 = vmatpush1.xpose.msra.mxu0 0.0
        %736 = vmatprep.subr.mxu0 0.0
        %737 = vmatpush1.xpose.msra.mxu0 0.0
        %738 = vmatprep.subr.mxu0 0.0
        %739 = vmatpush1.xpose.msra.mxu0 0.0
        %740 = vmatprep.subr.mxu0 0.0
        %741 = vmatpush1.xpose.msra.mxu0 0.0
        %742 = vmatprep.subr.mxu0 0.0
        %743 = vmatpush1.xpose.msra.mxu0 0.0
        %744 = vmatprep.subr.mxu0 0.0
        %745 = vmatpush1.xpose.msra.mxu0 0.0
        %746 = vmatprep.subr.mxu0 0.0
        %747 = vmatpush1.xpose.msra.mxu0 0.0
        %748 = vmatprep.subr.mxu0 0.0
        %749 = vmatpush1.xpose.msra.mxu0 %v716
        %750 = vmatprep.subr.mxu0 0.0
        %751 = vmatpush2.xpose.msra.mxu0 0.0
        %752 = vmatprep.subr.mxu0 0.0
        %753 = vmatpush2.xpose.msra.mxu0 0.0
        %754 = vmatprep.subr.mxu0 0.0
        %755 = vmatpush2.xpose.msra.mxu0 0.0
        %756 = vmatprep.subr.mxu0 0.0
        %757 = vmatpush2.xpose.msra.mxu0 0.0
        %758 = vmatprep.subr.mxu0 0.0
        %759 = vmatpush2.xpose.msra.mxu0 0.0
        %760 = vmatprep.subr.mxu0 0.0
        %761 = vmatpush2.xpose.msra.mxu0 0.0
        %762 = vmatprep.subr.mxu0 0.0
        %763 = vmatpush2.xpose.msra.mxu0 0.0
        %764 = vmatprep.subr.mxu0 0.0
        %765 = vmatpush2.xpose.msra.mxu0 0.0
        %766 = vmatprep.subr.mxu0 0.0
        %767 = vmatpush2.xpose.msra.mxu0 0.0
        %768 = vmatprep.subr.mxu0 0.0
        %769 = vmatpush2.xpose.msra.mxu0 0.0
        %770 = vmatprep.subr.mxu0 0.0
        %771 = vmatpush2.xpose.msra.mxu0 0.0
        %772 = vmatprep.subr.mxu0 0.0
        %773 = vmatpush2.xpose.msra.mxu0 0.0
        %774 = vmatprep.subr.mxu0 0.0
        %775 = vmatpush2.xpose.msra.mxu0 0.0
        %776 = vmatprep.subr.mxu0 0.0
        %777 = vmatpush2.xpose.msra.mxu0 0.0
        %778 = vmatprep.subr.mxu0 0.0
        %779 = vmatpush2.xpose.msra.mxu0 0.0
        %780 = vmatprep.subr.mxu0 0.0
        %781 = vmatpush2.xpose.msra.mxu0 0.0
        %782 = vmatprep.mubr.f32.mxu0 0.0
        %783 = vmatmul.mubr.f32.gmra.mxu0 %v714
        %v784 = vpop.f32.mrf.mxu0
        %v785 = vadd.f32 0.0, %v784
        %v786 = vpop.f32.mrf.mxu0
        %787 = vdwg.mxu0
        %789 = vrot.lane.b32.xlu0 %v560, 120
        %v790 = vpop.permute.xlu0 %789
        %v791 = vsel %vm636, %v560, 0
        %v793 = vsel %vm636, %v790, 0
        %795 = vmatprep.subr.mxu0 0.0
        %796 = vmatpush1.xpose.msra.mxu0 0.0
        %797 = vmatprep.subr.mxu0 0.0
        %798 = vmatpush1.xpose.msra.mxu0 0.0
        %799 = vmatprep.subr.mxu0 0.0
        %800 = vmatpush1.xpose.msra.mxu0 0.0
        %801 = vmatprep.subr.mxu0 0.0
        %802 = vmatpush1.xpose.msra.mxu0 0.0
        %803 = vmatprep.subr.mxu0 0.0
        %804 = vmatpush1.xpose.msra.mxu0 0.0
        %805 = vmatprep.subr.mxu0 0.0
        %806 = vmatpush1.xpose.msra.mxu0 0.0
        %807 = vmatprep.subr.mxu0 0.0
        %808 = vmatpush1.xpose.msra.mxu0 0.0
        %809 = vmatprep.subr.mxu0 0.0
        %810 = vmatpush1.xpose.msra.mxu0 0.0
        %811 = vmatprep.subr.mxu0 0.0
        %812 = vmatpush1.xpose.msra.mxu0 0.0
        %813 = vmatprep.subr.mxu0 0.0
        %814 = vmatpush1.xpose.msra.mxu0 0.0
        %815 = vmatprep.subr.mxu0 0.0
        %816 = vmatpush1.xpose.msra.mxu0 0.0
        %817 = vmatprep.subr.mxu0 0.0
        %818 = vmatpush1.xpose.msra.mxu0 0.0
        %819 = vmatprep.subr.mxu0 0.0
        %820 = vmatpush1.xpose.msra.mxu0 0.0
        %821 = vmatprep.subr.mxu0 0.0
        %822 = vmatpush1.xpose.msra.mxu0 0.0
        %823 = vmatprep.subr.mxu0 0.0
        %824 = vmatpush1.xpose.msra.mxu0 0.0
        %825 = vmatprep.subr.mxu0 0.0
        %826 = vmatpush1.xpose.msra.mxu0 %v793
        %827 = vmatprep.subr.mxu0 0.0
        %828 = vmatpush2.xpose.msra.mxu0 0.0
        %829 = vmatprep.subr.mxu0 0.0
        %830 = vmatpush2.xpose.msra.mxu0 0.0
        %831 = vmatprep.subr.mxu0 0.0
        %832 = vmatpush2.xpose.msra.mxu0 0.0
        %833 = vmatprep.subr.mxu0 0.0
        %834 = vmatpush2.xpose.msra.mxu0 0.0
        %835 = vmatprep.subr.mxu0 0.0
        %836 = vmatpush2.xpose.msra.mxu0 0.0
        %837 = vmatprep.subr.mxu0 0.0
        %838 = vmatpush2.xpose.msra.mxu0 0.0
        %839 = vmatprep.subr.mxu0 0.0
        %840 = vmatpush2.xpose.msra.mxu0 0.0
        %841 = vmatprep.subr.mxu0 0.0
        %842 = vmatpush2.xpose.msra.mxu0 0.0
        %843 = vmatprep.subr.mxu0 0.0
        %844 = vmatpush2.xpose.msra.mxu0 0.0
        %845 = vmatprep.subr.mxu0 0.0
        %846 = vmatpush2.xpose.msra.mxu0 0.0
        %847 = vmatprep.subr.mxu0 0.0
        %848 = vmatpush2.xpose.msra.mxu0 0.0
        %849 = vmatprep.subr.mxu0 0.0
        %850 = vmatpush2.xpose.msra.mxu0 0.0
        %851 = vmatprep.subr.mxu0 0.0
        %852 = vmatpush2.xpose.msra.mxu0 0.0
        %853 = vmatprep.subr.mxu0 0.0
        %854 = vmatpush2.xpose.msra.mxu0 0.0
        %855 = vmatprep.subr.mxu0 0.0
        %856 = vmatpush2.xpose.msra.mxu0 0.0
        %857 = vmatprep.subr.mxu0 0.0
        %858 = vmatpush2.xpose.msra.mxu0 0.0
        %859 = vmatprep.mubr.f32.mxu0 0.0
        %860 = vmatmul.mubr.f32.gmra.mxu0 %v791
        %v861 = vpop.f32.mrf.mxu0
        %v862 = vadd.f32 0.0, %v861
        %v863 = vpop.f32.mrf.mxu0
        %864 = vdwg.mxu0
        %866 = vrot.lane.b32.xlu0 %v630, 120
        %v867 = vpop.permute.xlu0 %866
        %v868 = vsel %vm636, %v630, 0
        %v870 = vsel %vm636, %v867, 0
        %872 = vmatprep.subr.mxu0 0.0
        %873 = vmatpush1.xpose.msra.mxu0 0.0
        %874 = vmatprep.subr.mxu0 0.0
        %875 = vmatpush1.xpose.msra.mxu0 0.0
        %876 = vmatprep.subr.mxu0 0.0
        %877 = vmatpush1.xpose.msra.mxu0 0.0
        %878 = vmatprep.subr.mxu0 0.0
        %879 = vmatpush1.xpose.msra.mxu0 0.0
        %880 = vmatprep.subr.mxu0 0.0
        %881 = vmatpush1.xpose.msra.mxu0 0.0
        %882 = vmatprep.subr.mxu0 0.0
        %883 = vmatpush1.xpose.msra.mxu0 0.0
        %884 = vmatprep.subr.mxu0 0.0
        %885 = vmatpush1.xpose.msra.mxu0 0.0
        %886 = vmatprep.subr.mxu0 0.0
        %887 = vmatpush1.xpose.msra.mxu0 0.0
        %888 = vmatprep.subr.mxu0 0.0
        %889 = vmatpush1.xpose.msra.mxu0 0.0
        %890 = vmatprep.subr.mxu0 0.0
        %891 = vmatpush1.xpose.msra.mxu0 0.0
        %892 = vmatprep.subr.mxu0 0.0
        %893 = vmatpush1.xpose.msra.mxu0 0.0
        %894 = vmatprep.subr.mxu0 0.0
        %895 = vmatpush1.xpose.msra.mxu0 0.0
        %896 = vmatprep.subr.mxu0 0.0
        %897 = vmatpush1.xpose.msra.mxu0 0.0
        %898 = vmatprep.subr.mxu0 0.0
        %899 = vmatpush1.xpose.msra.mxu0 0.0
        %900 = vmatprep.subr.mxu0 0.0
        %901 = vmatpush1.xpose.msra.mxu0 0.0
        %902 = vmatprep.subr.mxu0 0.0
        %903 = vmatpush1.xpose.msra.mxu0 %v870
        %904 = vmatprep.subr.mxu0 0.0
        %905 = vmatpush2.xpose.msra.mxu0 0.0
        %906 = vmatprep.subr.mxu0 0.0
        %907 = vmatpush2.xpose.msra.mxu0 0.0
        %908 = vmatprep.subr.mxu0 0.0
        %909 = vmatpush2.xpose.msra.mxu0 0.0
        %910 = vmatprep.subr.mxu0 0.0
        %911 = vmatpush2.xpose.msra.mxu0 0.0
        %912 = vmatprep.subr.mxu0 0.0
        %913 = vmatpush2.xpose.msra.mxu0 0.0
        %914 = vmatprep.subr.mxu0 0.0
        %915 = vmatpush2.xpose.msra.mxu0 0.0
        %916 = vmatprep.subr.mxu0 0.0
        %917 = vmatpush2.xpose.msra.mxu0 0.0
        %918 = vmatprep.subr.mxu0 0.0
        %919 = vmatpush2.xpose.msra.mxu0 0.0
        %920 = vmatprep.subr.mxu0 0.0
        %921 = vmatpush2.xpose.msra.mxu0 0.0
        %922 = vmatprep.subr.mxu0 0.0
        %923 = vmatpush2.xpose.msra.mxu0 0.0
        %924 = vmatprep.subr.mxu0 0.0
        %925 = vmatpush2.xpose.msra.mxu0 0.0
        %926 = vmatprep.subr.mxu0 0.0
        %927 = vmatpush2.xpose.msra.mxu0 0.0
        %928 = vmatprep.subr.mxu0 0.0
        %929 = vmatpush2.xpose.msra.mxu0 0.0
        %930 = vmatprep.subr.mxu0 0.0
        %931 = vmatpush2.xpose.msra.mxu0 0.0
        %932 = vmatprep.subr.mxu0 0.0
        %933 = vmatpush2.xpose.msra.mxu0 0.0
        %934 = vmatprep.subr.mxu0 0.0
        %935 = vmatpush2.xpose.msra.mxu0 0.0
        %936 = vmatprep.mubr.f32.mxu0 0.0
        %937 = vmatmul.mubr.f32.gmra.mxu0 %v868
        %v938 = vpop.f32.mrf.mxu0
        %v939 = vadd.f32 0.0, %v938
        %v940 = vpop.f32.mrf.mxu0
        %941 = vdwg.mxu0
        %v942 = vsel %vm636, %v708, -inf
        %943 = vmax.xlane.f32.xlu0 %v942
        %v944 = vpop.xlane.xlu0 %943
        %v945 = vsel %vm636, %v785, -inf
        %946 = vmax.xlane.f32.xlu0 %v945
        %v947 = vpop.xlane.xlu0 %946
        %v948 = vsel %vm636, %v862, -inf
        %949 = vmax.xlane.f32.xlu0 %v948
        %v950 = vpop.xlane.xlu0 %949
        %v951 = vsel %vm636, %v939, -inf
        %952 = vmax.xlane.f32.xlu0 %v951
        %v953 = vpop.xlane.xlu0 %952
        %v954 = vsub.f32 %v708, %v944
        %v955 = vsub.f32 %v785, %v947
        %v956 = vsub.f32 %v862, %v950
        %v957 = vsub.f32 %v939, %v953
        %v958 = vmul.f32 %v954, 1.442695
        %v959 = vpow.pop %v958
        %v960 = vmul.f32 %v955, 1.442695
        %v961 = vpow.pop %v960
        %v962 = vmul.f32 %v956, 1.442695
        %v963 = vpow.pop %v962
        %v964 = vmul.f32 %v957, 1.442695
        %v965 = vpow.pop %v964
        %v966 = vsel %vm636, %v959, 0.0
        %967 = vadd.xlane.f32.xlu0 %v966
        %v968 = vpop.xlane.xlu0 %967
        %v969 = vsel %vm636, %v961, 0.0
        %970 = vadd.xlane.f32.xlu0 %v969
        %v971 = vpop.xlane.xlu0 %970
        %v972 = vsel %vm636, %v963, 0.0
        %973 = vadd.xlane.f32.xlu0 %v972
        %v974 = vpop.xlane.xlu0 %973
        %v975 = vsel %vm636, %v965, 0.0
        %976 = vadd.xlane.f32.xlu0 %v975
        %v977 = vpop.xlane.xlu0 %976
        %v978 = vrcp.pop %v968
        %v979 = vrcp.pop %v971
        %v980 = vrcp.pop %v974
        %v981 = vrcp.pop %v977
        %v982 = vmul.f32 %v959, %v978
        %v983 = vmul.f32 %v961, %v979
        %v984 = vmul.f32 %v963, %v980
        %v985 = vmul.f32 %v965, %v981
        %986 = vrot.lane.b32.xlu0 %v420, 112
        %v987 = vpop.permute.xlu0 %986
        %v990 = vsel %vm636, %v982, 0
        %992 = vmatprep.subr.mxu0 0.0
        %993 = vmatpush1.msra.mxu0 0.0
        %994 = vmatprep.subr.mxu0 0.0
        %995 = vmatpush1.msra.mxu0 0.0
        %996 = vmatprep.subr.mxu0 0.0
        %997 = vmatpush1.msra.mxu0 0.0
        %998 = vmatprep.subr.mxu0 0.0
        %999 = vmatpush1.msra.mxu0 0.0
        %1000 = vmatprep.subr.mxu0 0.0
        %1001 = vmatpush1.msra.mxu0 0.0
        %1002 = vmatprep.subr.mxu0 0.0
        %1003 = vmatpush1.msra.mxu0 0.0
        %1004 = vmatprep.subr.mxu0 0.0
        %1005 = vmatpush1.msra.mxu0 0.0
        %1006 = vmatprep.subr.mxu0 0.0
        %1007 = vmatpush1.msra.mxu0 0.0
        %1008 = vmatprep.subr.mxu0 0.0
        %1009 = vmatpush1.msra.mxu0 0.0
        %1010 = vmatprep.subr.mxu0 0.0
        %1011 = vmatpush1.msra.mxu0 0.0
        %1012 = vmatprep.subr.mxu0 0.0
        %1013 = vmatpush1.msra.mxu0 0.0
        %1014 = vmatprep.subr.mxu0 0.0
        %1015 = vmatpush1.msra.mxu0 0.0
        %1016 = vmatprep.subr.mxu0 0.0
        %1017 = vmatpush1.msra.mxu0 0.0
        %1018 = vmatprep.subr.mxu0 0.0
        %1019 = vmatpush1.msra.mxu0 0.0
        %1020 = vmatprep.subr.mxu0 0.0
        %1021 = vmatpush1.msra.mxu0 0.0
        %1022 = vmatprep.subr.mxu0 0.0
        %1023 = vmatpush1.msra.mxu0 %v987
        %1024 = vmatprep.subr.mxu0 0.0
        %1025 = vmatpush2.msra.mxu0 0.0
        %1026 = vmatprep.subr.mxu0 0.0
        %1027 = vmatpush2.msra.mxu0 0.0
        %1028 = vmatprep.subr.mxu0 0.0
        %1029 = vmatpush2.msra.mxu0 0.0
        %1030 = vmatprep.subr.mxu0 0.0
        %1031 = vmatpush2.msra.mxu0 0.0
        %1032 = vmatprep.subr.mxu0 0.0
        %1033 = vmatpush2.msra.mxu0 0.0
        %1034 = vmatprep.subr.mxu0 0.0
        %1035 = vmatpush2.msra.mxu0 0.0
        %1036 = vmatprep.subr.mxu0 0.0
        %1037 = vmatpush2.msra.mxu0 0.0
        %1038 = vmatprep.subr.mxu0 0.0
        %1039 = vmatpush2.msra.mxu0 0.0
        %1040 = vmatprep.subr.mxu0 0.0
        %1041 = vmatpush2.msra.mxu0 0.0
        %1042 = vmatprep.subr.mxu0 0.0
        %1043 = vmatpush2.msra.mxu0 0.0
        %1044 = vmatprep.subr.mxu0 0.0
        %1045 = vmatpush2.msra.mxu0 0.0
        %1046 = vmatprep.subr.mxu0 0.0
        %1047 = vmatpush2.msra.mxu0 0.0
        %1048 = vmatprep.subr.mxu0 0.0
        %1049 = vmatpush2.msra.mxu0 0.0
        %1050 = vmatprep.subr.mxu0 0.0
        %1051 = vmatpush2.msra.mxu0 0.0
        %1052 = vmatprep.subr.mxu0 0.0
        %1053 = vmatpush2.msra.mxu0 0.0
        %1054 = vmatprep.subr.mxu0 0.0
        %1055 = vmatpush2.msra.mxu0 0.0
        %1056 = vmatprep.mubr.f32.mxu0 0.0
        %1057 = vmatmul.mubr.f32.gmra.mxu0 %v990
        %v1058 = vpop.f32.mrf.mxu0
        %v1059 = vadd.f32 0.0, %v1058
        %v1060 = vpop.f32.mrf.mxu0
        %1061 = vdwg.mxu0
        %1062 = vrot.lane.b32.xlu0 %v490, 112
        %v1063 = vpop.permute.xlu0 %1062
        %v1066 = vsel %vm636, %v983, 0
        %1068 = vmatprep.subr.mxu0 0.0
        %1069 = vmatpush1.msra.mxu0 0.0
        %1070 = vmatprep.subr.mxu0 0.0
        %1071 = vmatpush1.msra.mxu0 0.0
        %1072 = vmatprep.subr.mxu0 0.0
        %1073 = vmatpush1.msra.mxu0 0.0
        %1074 = vmatprep.subr.mxu0 0.0
        %1075 = vmatpush1.msra.mxu0 0.0
        %1076 = vmatprep.subr.mxu0 0.0
        %1077 = vmatpush1.msra.mxu0 0.0
        %1078 = vmatprep.subr.mxu0 0.0
        %1079 = vmatpush1.msra.mxu0 0.0
        %1080 = vmatprep.subr.mxu0 0.0
        %1081 = vmatpush1.msra.mxu0 0.0
        %1082 = vmatprep.subr.mxu0 0.0
        %1083 = vmatpush1.msra.mxu0 0.0
        %1084 = vmatprep.subr.mxu0 0.0
        %1085 = vmatpush1.msra.mxu0 0.0
        %1086 = vmatprep.subr.mxu0 0.0
        %1087 = vmatpush1.msra.mxu0 0.0
        %1088 = vmatprep.subr.mxu0 0.0
        %1089 = vmatpush1.msra.mxu0 0.0
        %1090 = vmatprep.subr.mxu0 0.0
        %1091 = vmatpush1.msra.mxu0 0.0
        %1092 = vmatprep.subr.mxu0 0.0
        %1093 = vmatpush1.msra.mxu0 0.0
        %1094 = vmatprep.subr.mxu0 0.0
        %1095 = vmatpush1.msra.mxu0 0.0
        %1096 = vmatprep.subr.mxu0 0.0
        %1097 = vmatpush1.msra.mxu0 0.0
        %1098 = vmatprep.subr.mxu0 0.0
        %1099 = vmatpush1.msra.mxu0 %v1063
        %1100 = vmatprep.subr.mxu0 0.0
        %1101 = vmatpush2.msra.mxu0 0.0
        %1102 = vmatprep.subr.mxu0 0.0
        %1103 = vmatpush2.msra.mxu0 0.0
        %1104 = vmatprep.subr.mxu0 0.0
        %1105 = vmatpush2.msra.mxu0 0.0
        %1106 = vmatprep.subr.mxu0 0.0
        %1107 = vmatpush2.msra.mxu0 0.0
        %1108 = vmatprep.subr.mxu0 0.0
        %1109 = vmatpush2.msra.mxu0 0.0
        %1110 = vmatprep.subr.mxu0 0.0
        %1111 = vmatpush2.msra.mxu0 0.0
        %1112 = vmatprep.subr.mxu0 0.0
        %1113 = vmatpush2.msra.mxu0 0.0
        %1114 = vmatprep.subr.mxu0 0.0
        %1115 = vmatpush2.msra.mxu0 0.0
        %1116 = vmatprep.subr.mxu0 0.0
        %1117 = vmatpush2.msra.mxu0 0.0
        %1118 = vmatprep.subr.mxu0 0.0
        %1119 = vmatpush2.msra.mxu0 0.0
        %1120 = vmatprep.subr.mxu0 0.0
        %1121 = vmatpush2.msra.mxu0 0.0
        %1122 = vmatprep.subr.mxu0 0.0
        %1123 = vmatpush2.msra.mxu0 0.0
        %1124 = vmatprep.subr.mxu0 0.0
        %1125 = vmatpush2.msra.mxu0 0.0
        %1126 = vmatprep.subr.mxu0 0.0
        %1127 = vmatpush2.msra.mxu0 0.0
        %1128 = vmatprep.subr.mxu0 0.0
        %1129 = vmatpush2.msra.mxu0 0.0
        %1130 = vmatprep.subr.mxu0 0.0
        %1131 = vmatpush2.msra.mxu0 0.0
        %1132 = vmatprep.mubr.f32.mxu0 0.0
        %1133 = vmatmul.mubr.f32.gmra.mxu0 %v1066
        %v1134 = vpop.f32.mrf.mxu0
        %v1135 = vadd.f32 0.0, %v1134
        %v1136 = vpop.f32.mrf.mxu0
        %1137 = vdwg.mxu0
        %1138 = vrot.lane.b32.xlu0 %v560, 112
        %v1139 = vpop.permute.xlu0 %1138
        %v1142 = vsel %vm636, %v984, 0
        %1144 = vmatprep.subr.mxu0 0.0
        %1145 = vmatpush1.msra.mxu0 0.0
        %1146 = vmatprep.subr.mxu0 0.0
        %1147 = vmatpush1.msra.mxu0 0.0
        %1148 = vmatprep.subr.mxu0 0.0
        %1149 = vmatpush1.msra.mxu0 0.0
        %1150 = vmatprep.subr.mxu0 0.0
        %1151 = vmatpush1.msra.mxu0 0.0
        %1152 = vmatprep.subr.mxu0 0.0
        %1153 = vmatpush1.msra.mxu0 0.0
        %1154 = vmatprep.subr.mxu0 0.0
        %1155 = vmatpush1.msra.mxu0 0.0
        %1156 = vmatprep.subr.mxu0 0.0
        %1157 = vmatpush1.msra.mxu0 0.0
        %1158 = vmatprep.subr.mxu0 0.0
        %1159 = vmatpush1.msra.mxu0 0.0
        %1160 = vmatprep.subr.mxu0 0.0
        %1161 = vmatpush1.msra.mxu0 0.0
        %1162 = vmatprep.subr.mxu0 0.0
        %1163 = vmatpush1.msra.mxu0 0.0
        %1164 = vmatprep.subr.mxu0 0.0
        %1165 = vmatpush1.msra.mxu0 0.0
        %1166 = vmatprep.subr.mxu0 0.0
        %1167 = vmatpush1.msra.mxu0 0.0
        %1168 = vmatprep.subr.mxu0 0.0
        %1169 = vmatpush1.msra.mxu0 0.0
        %1170 = vmatprep.subr.mxu0 0.0
        %1171 = vmatpush1.msra.mxu0 0.0
        %1172 = vmatprep.subr.mxu0 0.0
        %1173 = vmatpush1.msra.mxu0 0.0
        %1174 = vmatprep.subr.mxu0 0.0
        %1175 = vmatpush1.msra.mxu0 %v1139
        %1176 = vmatprep.subr.mxu0 0.0
        %1177 = vmatpush2.msra.mxu0 0.0
        %1178 = vmatprep.subr.mxu0 0.0
        %1179 = vmatpush2.msra.mxu0 0.0
        %1180 = vmatprep.subr.mxu0 0.0
        %1181 = vmatpush2.msra.mxu0 0.0
        %1182 = vmatprep.subr.mxu0 0.0
        %1183 = vmatpush2.msra.mxu0 0.0
        %1184 = vmatprep.subr.mxu0 0.0
        %1185 = vmatpush2.msra.mxu0 0.0
        %1186 = vmatprep.subr.mxu0 0.0
        %1187 = vmatpush2.msra.mxu0 0.0
        %1188 = vmatprep.subr.mxu0 0.0
        %1189 = vmatpush2.msra.mxu0 0.0
        %1190 = vmatprep.subr.mxu0 0.0
        %1191 = vmatpush2.msra.mxu0 0.0
        %1192 = vmatprep.subr.mxu0 0.0
        %1193 = vmatpush2.msra.mxu0 0.0
        %1194 = vmatprep.subr.mxu0 0.0
        %1195 = vmatpush2.msra.mxu0 0.0
        %1196 = vmatprep.subr.mxu0 0.0
        %1197 = vmatpush2.msra.mxu0 0.0
        %1198 = vmatprep.subr.mxu0 0.0
        %1199 = vmatpush2.msra.mxu0 0.0
        %1200 = vmatprep.subr.mxu0 0.0
        %1201 = vmatpush2.msra.mxu0 0.0
        %1202 = vmatprep.subr.mxu0 0.0
        %1203 = vmatpush2.msra.mxu0 0.0
        %1204 = vmatprep.subr.mxu0 0.0
        %1205 = vmatpush2.msra.mxu0 0.0
        %1206 = vmatprep.subr.mxu0 0.0
        %1207 = vmatpush2.msra.mxu0 0.0
        %1208 = vmatprep.mubr.f32.mxu0 0.0
        %1209 = vmatmul.mubr.f32.gmra.mxu0 %v1142
        %v1210 = vpop.f32.mrf.mxu0
        %v1211 = vadd.f32 0.0, %v1210
        %v1212 = vpop.f32.mrf.mxu0
        %1213 = vdwg.mxu0
        %1214 = vrot.lane.b32.xlu0 %v630, 112
        %v1215 = vpop.permute.xlu0 %1214
        %v1218 = vsel %vm636, %v985, 0
        %1220 = vmatprep.subr.mxu0 0.0
        %1221 = vmatpush1.msra.mxu0 0.0
        %1222 = vmatprep.subr.mxu0 0.0
        %1223 = vmatpush1.msra.mxu0 0.0
        %1224 = vmatprep.subr.mxu0 0.0
        %1225 = vmatpush1.msra.mxu0 0.0
        %1226 = vmatprep.subr.mxu0 0.0
        %1227 = vmatpush1.msra.mxu0 0.0
        %1228 = vmatprep.subr.mxu0 0.0
        %1229 = vmatpush1.msra.mxu0 0.0
        %1230 = vmatprep.subr.mxu0 0.0
        %1231 = vmatpush1.msra.mxu0 0.0
        %1232 = vmatprep.subr.mxu0 0.0
        %1233 = vmatpush1.msra.mxu0 0.0
        %1234 = vmatprep.subr.mxu0 0.0
        %1235 = vmatpush1.msra.mxu0 0.0
        %1236 = vmatprep.subr.mxu0 0.0
        %1237 = vmatpush1.msra.mxu0 0.0
        %1238 = vmatprep.subr.mxu0 0.0
        %1239 = vmatpush1.msra.mxu0 0.0
        %1240 = vmatprep.subr.mxu0 0.0
        %1241 = vmatpush1.msra.mxu0 0.0
        %1242 = vmatprep.subr.mxu0 0.0
        %1243 = vmatpush1.msra.mxu0 0.0
        %1244 = vmatprep.subr.mxu0 0.0
        %1245 = vmatpush1.msra.mxu0 0.0
        %1246 = vmatprep.subr.mxu0 0.0
        %1247 = vmatpush1.msra.mxu0 0.0
        %1248 = vmatprep.subr.mxu0 0.0
        %1249 = vmatpush1.msra.mxu0 0.0
        %1250 = vmatprep.subr.mxu0 0.0
        %1251 = vmatpush1.msra.mxu0 %v1215
        %1252 = vmatprep.subr.mxu0 0.0
        %1253 = vmatpush2.msra.mxu0 0.0
        %1254 = vmatprep.subr.mxu0 0.0
        %1255 = vmatpush2.msra.mxu0 0.0
        %1256 = vmatprep.subr.mxu0 0.0
        %1257 = vmatpush2.msra.mxu0 0.0
        %1258 = vmatprep.subr.mxu0 0.0
        %1259 = vmatpush2.msra.mxu0 0.0
        %1260 = vmatprep.subr.mxu0 0.0
        %1261 = vmatpush2.msra.mxu0 0.0
        %1262 = vmatprep.subr.mxu0 0.0
        %1263 = vmatpush2.msra.mxu0 0.0
        %1264 = vmatprep.subr.mxu0 0.0
        %1265 = vmatpush2.msra.mxu0 0.0
        %1266 = vmatprep.subr.mxu0 0.0
        %1267 = vmatpush2.msra.mxu0 0.0
        %1268 = vmatprep.subr.mxu0 0.0
        %1269 = vmatpush2.msra.mxu0 0.0
        %1270 = vmatprep.subr.mxu0 0.0
        %1271 = vmatpush2.msra.mxu0 0.0
        %1272 = vmatprep.subr.mxu0 0.0
        %1273 = vmatpush2.msra.mxu0 0.0
        %1274 = vmatprep.subr.mxu0 0.0
        %1275 = vmatpush2.msra.mxu0 0.0
        %1276 = vmatprep.subr.mxu0 0.0
        %1277 = vmatpush2.msra.mxu0 0.0
        %1278 = vmatprep.subr.mxu0 0.0
        %1279 = vmatpush2.msra.mxu0 0.0
        %1280 = vmatprep.subr.mxu0 0.0
        %1281 = vmatpush2.msra.mxu0 0.0
        %1282 = vmatprep.subr.mxu0 0.0
        %1283 = vmatpush2.msra.mxu0 0.0
        %1284 = vmatprep.mubr.f32.mxu0 0.0
        %1285 = vmatmul.mubr.f32.gmra.mxu0 %v1218
        %v1286 = vpop.f32.mrf.mxu0
        %v1287 = vadd.f32 0.0, %v1286
        %v1288 = vpop.f32.mrf.mxu0
        %1289 = vdwg.mxu0
        %v1290 = vld [vmem:[%s5] sm:$0xff]
        %v1291 = vld [vmem:[%s5 + $0x8] sm:$0xff]
        %v1292 = vld [vmem:[%s5 + $0x10] sm:$0xff]
        %v1293 = vld [vmem:[%s5 + $0x18] sm:$0xff]
        %v1295 = vsel %vm636, %v1059, 0
        %1297 = vmatprep.subr.mxu0 0.0
        %1298 = vmatpush1.msra.mxu0 0.0
        %1299 = vmatprep.subr.mxu0 0.0
        %1300 = vmatpush1.msra.mxu0 0.0
        %1301 = vmatprep.subr.mxu0 0.0
        %1302 = vmatpush1.msra.mxu0 0.0
        %1303 = vmatprep.subr.mxu0 0.0
        %1304 = vmatpush1.msra.mxu0 0.0
        %1305 = vmatprep.subr.mxu0 0.0
        %1306 = vmatpush1.msra.mxu0 0.0
        %1307 = vmatprep.subr.mxu0 0.0
        %1308 = vmatpush1.msra.mxu0 0.0
        %1309 = vmatprep.subr.mxu0 0.0
        %1310 = vmatpush1.msra.mxu0 0.0
        %1311 = vmatprep.subr.mxu0 0.0
        %1312 = vmatpush1.msra.mxu0 0.0
        %1313 = vmatprep.subr.mxu0 0.0
        %1314 = vmatpush1.msra.mxu0 0.0
        %1315 = vmatprep.subr.mxu0 0.0
        %1316 = vmatpush1.msra.mxu0 0.0
        %1317 = vmatprep.subr.mxu0 0.0
        %1318 = vmatpush1.msra.mxu0 0.0
        %1319 = vmatprep.subr.mxu0 0.0
        %1320 = vmatpush1.msra.mxu0 0.0
        %1321 = vmatprep.subr.mxu0 0.0
        %1322 = vmatpush1.msra.mxu0 0.0
        %1323 = vmatprep.subr.mxu0 0.0
        %1324 = vmatpush1.msra.mxu0 0.0
        %1325 = vmatprep.subr.mxu0 0.0
        %1326 = vmatpush1.msra.mxu0 0.0
        %1327 = vmatprep.subr.mxu0 0.0
        %1328 = vmatpush1.msra.mxu0 %v1290
        %1329 = vmatprep.subr.mxu0 0.0
        %1330 = vmatpush2.msra.mxu0 0.0
        %1331 = vmatprep.subr.mxu0 0.0
        %1332 = vmatpush2.msra.mxu0 0.0
        %1333 = vmatprep.subr.mxu0 0.0
        %1334 = vmatpush2.msra.mxu0 0.0
        %1335 = vmatprep.subr.mxu0 0.0
        %1336 = vmatpush2.msra.mxu0 0.0
        %1337 = vmatprep.subr.mxu0 0.0
        %1338 = vmatpush2.msra.mxu0 0.0
        %1339 = vmatprep.subr.mxu0 0.0
        %1340 = vmatpush2.msra.mxu0 0.0
        %1341 = vmatprep.subr.mxu0 0.0
        %1342 = vmatpush2.msra.mxu0 0.0
        %1343 = vmatprep.subr.mxu0 0.0
        %1344 = vmatpush2.msra.mxu0 0.0
        %1345 = vmatprep.subr.mxu0 0.0
        %1346 = vmatpush2.msra.mxu0 0.0
        %1347 = vmatprep.subr.mxu0 0.0
        %1348 = vmatpush2.msra.mxu0 0.0
        %1349 = vmatprep.subr.mxu0 0.0
        %1350 = vmatpush2.msra.mxu0 0.0
        %1351 = vmatprep.subr.mxu0 0.0
        %1352 = vmatpush2.msra.mxu0 0.0
        %1353 = vmatprep.subr.mxu0 0.0
        %1354 = vmatpush2.msra.mxu0 0.0
        %1355 = vmatprep.subr.mxu0 0.0
        %1356 = vmatpush2.msra.mxu0 0.0
        %1357 = vmatprep.subr.mxu0 0.0
        %1358 = vmatpush2.msra.mxu0 0.0
        %1359 = vmatprep.subr.mxu0 0.0
        %1360 = vmatpush2.msra.mxu0 0.0
        %1361 = vmatprep.mubr.f32.mxu0 0.0
        %1362 = vmatmul.mubr.f32.gmra.mxu0 %v1295
        %v1363 = vpop.f32.mrf.mxu0
        %v1364 = vadd.f32 0.0, %v1363
        %v1365 = vpop.f32.mrf.mxu0
        %1366 = vdwg.mxu0
        %v1368 = vsel %vm636, %v1135, 0
        %1370 = vmatprep.subr.mxu0 0.0
        %1371 = vmatpush1.msra.mxu0 0.0
        %1372 = vmatprep.subr.mxu0 0.0
        %1373 = vmatpush1.msra.mxu0 0.0
        %1374 = vmatprep.subr.mxu0 0.0
        %1375 = vmatpush1.msra.mxu0 0.0
        %1376 = vmatprep.subr.mxu0 0.0
        %1377 = vmatpush1.msra.mxu0 0.0
        %1378 = vmatprep.subr.mxu0 0.0
        %1379 = vmatpush1.msra.mxu0 0.0
        %1380 = vmatprep.subr.mxu0 0.0
        %1381 = vmatpush1.msra.mxu0 0.0
        %1382 = vmatprep.subr.mxu0 0.0
        %1383 = vmatpush1.msra.mxu0 0.0
        %1384 = vmatprep.subr.mxu0 0.0
        %1385 = vmatpush1.msra.mxu0 0.0
        %1386 = vmatprep.subr.mxu0 0.0
        %1387 = vmatpush1.msra.mxu0 0.0
        %1388 = vmatprep.subr.mxu0 0.0
        %1389 = vmatpush1.msra.mxu0 0.0
        %1390 = vmatprep.subr.mxu0 0.0
        %1391 = vmatpush1.msra.mxu0 0.0
        %1392 = vmatprep.subr.mxu0 0.0
        %1393 = vmatpush1.msra.mxu0 0.0
        %1394 = vmatprep.subr.mxu0 0.0
        %1395 = vmatpush1.msra.mxu0 0.0
        %1396 = vmatprep.subr.mxu0 0.0
        %1397 = vmatpush1.msra.mxu0 0.0
        %1398 = vmatprep.subr.mxu0 0.0
        %1399 = vmatpush1.msra.mxu0 0.0
        %1400 = vmatprep.subr.mxu0 0.0
        %1401 = vmatpush1.msra.mxu0 %v1291
        %1402 = vmatprep.subr.mxu0 0.0
        %1403 = vmatpush2.msra.mxu0 0.0
        %1404 = vmatprep.subr.mxu0 0.0
        %1405 = vmatpush2.msra.mxu0 0.0
        %1406 = vmatprep.subr.mxu0 0.0
        %1407 = vmatpush2.msra.mxu0 0.0
        %1408 = vmatprep.subr.mxu0 0.0
        %1409 = vmatpush2.msra.mxu0 0.0
        %1410 = vmatprep.subr.mxu0 0.0
        %1411 = vmatpush2.msra.mxu0 0.0
        %1412 = vmatprep.subr.mxu0 0.0
        %1413 = vmatpush2.msra.mxu0 0.0
        %1414 = vmatprep.subr.mxu0 0.0
        %1415 = vmatpush2.msra.mxu0 0.0
        %1416 = vmatprep.subr.mxu0 0.0
        %1417 = vmatpush2.msra.mxu0 0.0
        %1418 = vmatprep.subr.mxu0 0.0
        %1419 = vmatpush2.msra.mxu0 0.0
        %1420 = vmatprep.subr.mxu0 0.0
        %1421 = vmatpush2.msra.mxu0 0.0
        %1422 = vmatprep.subr.mxu0 0.0
        %1423 = vmatpush2.msra.mxu0 0.0
        %1424 = vmatprep.subr.mxu0 0.0
        %1425 = vmatpush2.msra.mxu0 0.0
        %1426 = vmatprep.subr.mxu0 0.0
        %1427 = vmatpush2.msra.mxu0 0.0
        %1428 = vmatprep.subr.mxu0 0.0
        %1429 = vmatpush2.msra.mxu0 0.0
        %1430 = vmatprep.subr.mxu0 0.0
        %1431 = vmatpush2.msra.mxu0 0.0
        %1432 = vmatprep.subr.mxu0 0.0
        %1433 = vmatpush2.msra.mxu0 0.0
        %1434 = vmatprep.mubr.f32.mxu0 0.0
        %1435 = vmatmul.mubr.f32.gmra.mxu0 %v1368
        %v1436 = vpop.f32.mrf.mxu0
        %v1437 = vadd.f32 0.0, %v1436
        %v1438 = vpop.f32.mrf.mxu0
        %1439 = vdwg.mxu0
        %v1441 = vsel %vm636, %v1211, 0
        %1443 = vmatprep.subr.mxu0 0.0
        %1444 = vmatpush1.msra.mxu0 0.0
        %1445 = vmatprep.subr.mxu0 0.0
        %1446 = vmatpush1.msra.mxu0 0.0
        %1447 = vmatprep.subr.mxu0 0.0
        %1448 = vmatpush1.msra.mxu0 0.0
        %1449 = vmatprep.subr.mxu0 0.0
        %1450 = vmatpush1.msra.mxu0 0.0
        %1451 = vmatprep.subr.mxu0 0.0
        %1452 = vmatpush1.msra.mxu0 0.0
        %1453 = vmatprep.subr.mxu0 0.0
        %1454 = vmatpush1.msra.mxu0 0.0
        %1455 = vmatprep.subr.mxu0 0.0
        %1456 = vmatpush1.msra.mxu0 0.0
        %1457 = vmatprep.subr.mxu0 0.0
        %1458 = vmatpush1.msra.mxu0 0.0
        %1459 = vmatprep.subr.mxu0 0.0
        %1460 = vmatpush1.msra.mxu0 0.0
        %1461 = vmatprep.subr.mxu0 0.0
        %1462 = vmatpush1.msra.mxu0 0.0
        %1463 = vmatprep.subr.mxu0 0.0
        %1464 = vmatpush1.msra.mxu0 0.0
        %1465 = vmatprep.subr.mxu0 0.0
        %1466 = vmatpush1.msra.mxu0 0.0
        %1467 = vmatprep.subr.mxu0 0.0
        %1468 = vmatpush1.msra.mxu0 0.0
        %1469 = vmatprep.subr.mxu0 0.0
        %1470 = vmatpush1.msra.mxu0 0.0
        %1471 = vmatprep.subr.mxu0 0.0
        %1472 = vmatpush1.msra.mxu0 0.0
        %1473 = vmatprep.subr.mxu0 0.0
        %1474 = vmatpush1.msra.mxu0 %v1292
        %1475 = vmatprep.subr.mxu0 0.0
        %1476 = vmatpush2.msra.mxu0 0.0
        %1477 = vmatprep.subr.mxu0 0.0
        %1478 = vmatpush2.msra.mxu0 0.0
        %1479 = vmatprep.subr.mxu0 0.0
        %1480 = vmatpush2.msra.mxu0 0.0
        %1481 = vmatprep.subr.mxu0 0.0
        %1482 = vmatpush2.msra.mxu0 0.0
        %1483 = vmatprep.subr.mxu0 0.0
        %1484 = vmatpush2.msra.mxu0 0.0
        %1485 = vmatprep.subr.mxu0 0.0
        %1486 = vmatpush2.msra.mxu0 0.0
        %1487 = vmatprep.subr.mxu0 0.0
        %1488 = vmatpush2.msra.mxu0 0.0
        %1489 = vmatprep.subr.mxu0 0.0
        %1490 = vmatpush2.msra.mxu0 0.0
        %1491 = vmatprep.subr.mxu0 0.0
        %1492 = vmatpush2.msra.mxu0 0.0
        %1493 = vmatprep.subr.mxu0 0.0
        %1494 = vmatpush2.msra.mxu0 0.0
        %1495 = vmatprep.subr.mxu0 0.0
        %1496 = vmatpush2.msra.mxu0 0.0
        %1497 = vmatprep.subr.mxu0 0.0
        %1498 = vmatpush2.msra.mxu0 0.0
        %1499 = vmatprep.subr.mxu0 0.0
        %1500 = vmatpush2.msra.mxu0 0.0
        %1501 = vmatprep.subr.mxu0 0.0
        %1502 = vmatpush2.msra.mxu0 0.0
        %1503 = vmatprep.subr.mxu0 0.0
        %1504 = vmatpush2.msra.mxu0 0.0
        %1505 = vmatprep.subr.mxu0 0.0
        %1506 = vmatpush2.msra.mxu0 0.0
        %1507 = vmatprep.mubr.f32.mxu0 0.0
        %1508 = vmatmul.mubr.f32.gmra.mxu0 %v1441
        %v1509 = vpop.f32.mrf.mxu0
        %v1510 = vadd.f32 0.0, %v1509
        %v1511 = vpop.f32.mrf.mxu0
        %1512 = vdwg.mxu0
        %v1514 = vsel %vm636, %v1287, 0
        %1516 = vmatprep.subr.mxu0 0.0
        %1517 = vmatpush1.msra.mxu0 0.0
        %1518 = vmatprep.subr.mxu0 0.0
        %1519 = vmatpush1.msra.mxu0 0.0
        %1520 = vmatprep.subr.mxu0 0.0
        %1521 = vmatpush1.msra.mxu0 0.0
        %1522 = vmatprep.subr.mxu0 0.0
        %1523 = vmatpush1.msra.mxu0 0.0
        %1524 = vmatprep.subr.mxu0 0.0
        %1525 = vmatpush1.msra.mxu0 0.0
        %1526 = vmatprep.subr.mxu0 0.0
        %1527 = vmatpush1.msra.mxu0 0.0
        %1528 = vmatprep.subr.mxu0 0.0
        %1529 = vmatpush1.msra.mxu0 0.0
        %1530 = vmatprep.subr.mxu0 0.0
        %1531 = vmatpush1.msra.mxu0 0.0
        %1532 = vmatprep.subr.mxu0 0.0
        %1533 = vmatpush1.msra.mxu0 0.0
        %1534 = vmatprep.subr.mxu0 0.0
        %1535 = vmatpush1.msra.mxu0 0.0
        %1536 = vmatprep.subr.mxu0 0.0
        %1537 = vmatpush1.msra.mxu0 0.0
        %1538 = vmatprep.subr.mxu0 0.0
        %1539 = vmatpush1.msra.mxu0 0.0
        %1540 = vmatprep.subr.mxu0 0.0
        %1541 = vmatpush1.msra.mxu0 0.0
        %1542 = vmatprep.subr.mxu0 0.0
        %1543 = vmatpush1.msra.mxu0 0.0
        %1544 = vmatprep.subr.mxu0 0.0
        %1545 = vmatpush1.msra.mxu0 0.0
        %1546 = vmatprep.subr.mxu0 0.0
        %1547 = vmatpush1.msra.mxu0 %v1293
        %1548 = vmatprep.subr.mxu0 0.0
        %1549 = vmatpush2.msra.mxu0 0.0
        %1550 = vmatprep.subr.mxu0 0.0
        %1551 = vmatpush2.msra.mxu0 0.0
        %1552 = vmatprep.subr.mxu0 0.0
        %1553 = vmatpush2.msra.mxu0 0.0
        %1554 = vmatprep.subr.mxu0 0.0
        %1555 = vmatpush2.msra.mxu0 0.0
        %1556 = vmatprep.subr.mxu0 0.0
        %1557 = vmatpush2.msra.mxu0 0.0
        %1558 = vmatprep.subr.mxu0 0.0
        %1559 = vmatpush2.msra.mxu0 0.0
        %1560 = vmatprep.subr.mxu0 0.0
        %1561 = vmatpush2.msra.mxu0 0.0
        %1562 = vmatprep.subr.mxu0 0.0
        %1563 = vmatpush2.msra.mxu0 0.0
        %1564 = vmatprep.subr.mxu0 0.0
        %1565 = vmatpush2.msra.mxu0 0.0
        %1566 = vmatprep.subr.mxu0 0.0
        %1567 = vmatpush2.msra.mxu0 0.0
        %1568 = vmatprep.subr.mxu0 0.0
        %1569 = vmatpush2.msra.mxu0 0.0
        %1570 = vmatprep.subr.mxu0 0.0
        %1571 = vmatpush2.msra.mxu0 0.0
        %1572 = vmatprep.subr.mxu0 0.0
        %1573 = vmatpush2.msra.mxu0 0.0
        %1574 = vmatprep.subr.mxu0 0.0
        %1575 = vmatpush2.msra.mxu0 0.0
        %1576 = vmatprep.subr.mxu0 0.0
        %1577 = vmatpush2.msra.mxu0 0.0
        %1578 = vmatprep.subr.mxu0 0.0
        %1579 = vmatpush2.msra.mxu0 0.0
        %1580 = vmatprep.mubr.f32.mxu0 0.0
        %1581 = vmatmul.mubr.f32.gmra.mxu0 %v1514
        %v1582 = vpop.f32.mrf.mxu0
        %v1583 = vadd.f32 0.0, %v1582
        %v1584 = vpop.f32.mrf.mxu0
        %1585 = vdwg.mxu0
        %v1586 = vsel %vm275, %v1364, 0.0
        %v1587 = vsel %vm275, %v1437, 0.0
        %v1588 = vadd.f32 %v1586, %v1587
        %v1589 = vsel %vm275, %v1510, 0.0
        %v1590 = vadd.f32 %v1588, %v1589
        %v1591 = vsel %vm275, %v1583, 0.0
        %v1592 = vadd.f32 %v1590, %v1591
        %v1593 = vld [vmem:[%s6] sm:$0x1]
        %v1595 = vlaneseq
        %v1596 = vshrl.u32 %v1595, 7
        %v1597 = vsub.s32 0, %v1596
        %v1598 = vrot.slane %v1593, %v1597
        %v1600 = vadd.f32 %v1592, %v1598
        %v1601 = vadd.f32 %v274, %v1600
        %1602 = vst.msk [vmem:[%s269] sm:$0xff] %vm275, %v1601
        %s1603 = sand.u32 %s181, 1
        %s1604 = scalar_lea.sflag [#allocation3], %s1603
        %s1605 = sand.u32 %s181, 1
        %s1606 = smul.addr %s1605, 8
        %s1607 = scalar_lea.vmem [#allocation2], %s1606
        // Predicated region
        $region49: #{tpu_custom_call.1} parent=47 // pred_check
          %p1608 = pneg %p191
        $region50: #{tpu_custom_call.1} parent=47 // pred_check_branch
          %1610 = sbr.rel (%p1608) target = $region52
        $region51: #{tpu_custom_call.1} parent=47 // pred_region
          %s1612 = ssub.s32 128, 128
          %1613 = vsyncadd %s1604, %s1612
          %s1614 = smul.addr %s21, 128
          %s1615 = scalar_lea.hbm %s7, %s1614
          %s1617 = sshll.u32 %s1607, 4
          %s1618 = int_to_ptr.vmem [resolvable:$true] %s1617
          %1620 = dma.vmem_to_hbm [thread:$0]  %s1618, 128, %s1615, %s1604
        $region52: #{tpu_custom_call.1} parent=47 // pred_fallthru
          _
      $region48: #{tpu_custom_call.1} parent=5 // pred_fallthru
        _
      %p1621 = scmp.le.s32.totalorder 2, %s16
      // Predicated region
      $region53: #{tpu_custom_call.1} parent=5 // pred_check
        %p1622 = pneg %p1621
      $region54: #{tpu_custom_call.1} parent=5 // pred_check_branch
        %1624 = sbr.rel (%p1622) target = $region56
      $region55: #{tpu_custom_call.1} parent=5 // pred_region
        %s1625 = ssub.s32 %s16, 2
        // Predicated region
        $region57: #{tpu_custom_call.1} parent=55 // pred_check
          %p1626 = pneg %p197
        $region58: #{tpu_custom_call.1} parent=55 // pred_check_branch
          %1628 = sbr.rel (%p1626) target = $region60
        $region59: #{tpu_custom_call.1} parent=55 // pred_region
          %s1629 = sand.u32 %s182, 1
          %s1630 = scalar_lea.sflag [#allocation3], %s1629
          %s1631 = sand.u32 %s182, 1
          %s1632 = smul.addr %s1631, 8
          %s1633 = scalar_lea.vmem [#allocation2], %s1632
          %1634 = dma.done %s1630, 128
        $region60: #{tpu_custom_call.1} parent=55 // pred_fallthru
          _
      $region56: #{tpu_custom_call.1} parent=5 // pred_fallthru
        _
    $region6: #{tpu_custom_call.1} parent=1 // loop_footer
      %s20 = sadd.s32 1, %s16
    $region7: #{tpu_custom_call.1} parent=1 // loop_footer_branch
      %15 = sbr.rel target = $region3
    $region8: #{tpu_custom_call.1} parent=1 // loop_exit
      _
    %1635 = vsyncpa [#allocation3], 1
    %s1636 = scalar_lea.sflag [#allocation3], 1
    %1637 = vsyncpa %s1636, 1

</llo_original>
